<compile_context>
chip_gen: v7x
topology: tpu7x:2x2x1
jax: 0.10.0
libtpu: 0.0.40
codegen_flags: <defaults>
</compile_context>

<pallas_src>
import functools
import math

import jax
import jax.numpy as jnp
import numpy as np
from jax import lax
from jax.experimental import pallas as pl
from jax.experimental.pallas import tpu as pltpu


# ----------------------------------------------------------------------------
# Tiling helper
# ----------------------------------------------------------------------------

def _pick_tile(dim, target, align):
    """Largest multiple of `align` <= `target` that divides `dim`, else full dim.

    A block equal to the full dimension is always legal on TPU (the (8,128)
    divisibility rule only applies to blocks smaller than the array dim).
    """
    if dim <= target:
        return dim
    t = (target // align) * align
    while t >= align:
        if dim % t == 0:
            return t
        t -= align
    return dim


# ----------------------------------------------------------------------------
# Tiled matmul kernels (PyTorch nn.Linear layout: w is [N, K])
# ----------------------------------------------------------------------------

_CONTRACT_LAST = (((1,), (1,)), ((), ()))   # x[m,k] . w[n,k] -> [m,n], no transpose


def _matmul_kernel(x_ref, w_ref, o_ref, acc_ref):
    @pl.when(pl.program_id(2) == 0)
    def _init():
        acc_ref[...] = jnp.zeros_like(acc_ref)

    acc_ref[...] += lax.dot_general(
        x_ref[...], w_ref[...], _CONTRACT_LAST,
        preferred_element_type=jnp.float32)

    @pl.when(pl.program_id(2) == pl.num_programs(2) - 1)
    def _flush():
        o_ref[...] = acc_ref[...].astype(o_ref.dtype)


def _matmul_bias_kernel(x_ref, w_ref, b_ref, o_ref, acc_ref):
    @pl.when(pl.program_id(2) == 0)
    def _init():
        acc_ref[...] = jnp.zeros_like(acc_ref)

    acc_ref[...] += lax.dot_general(
        x_ref[...], w_ref[...], _CONTRACT_LAST,
        preferred_element_type=jnp.float32)

    @pl.when(pl.program_id(2) == pl.num_programs(2) - 1)
    def _flush():
        acc = acc_ref[...] + b_ref[...].astype(jnp.float32)
        o_ref[...] = acc.astype(o_ref.dtype)


def _qk_rope_matmul_kernel(x_ref, w_ref, b_ref, cos_ref, sin_ref, o_ref, acc_ref,
                           *, head_dim):
    """QK projection (bias) with the ChatGLM partial RoPE fused in the epilogue.

    The weight rows were deinterleaved per head in the wrapper, so within each
    head the columns are laid out as [rope_even(quarter) | rope_odd(quarter) |
    pass-through(half)] and the rotation is the plain rotate-half form on two
    contiguous, statically-sliced column ranges.
    """
    @pl.when(pl.program_id(2) == 0)
    def _init():
        acc_ref[...] = jnp.zeros_like(acc_ref)

    acc_ref[...] += lax.dot_general(
        x_ref[...], w_ref[...], _CONTRACT_LAST,
        preferred_element_type=jnp.float32)

    @pl.when(pl.program_id(2) == pl.num_programs(2) - 1)
    def _flush():
        acc = acc_ref[...] + b_ref[...].astype(jnp.float32)     # (tm, tn) f32
        cos = cos_ref[...]                                       # (tm, head_dim//4)
        sin = sin_ref[...]
        half = head_dim // 2
        quarter = half // 2
        out_dtype = o_ref.dtype
        n_heads_in_tile = acc.shape[1] // head_dim               # tn % head_dim == 0
        for h in range(n_heads_in_tile):                          # static unroll
            base = h * head_dim
            ev = acc[:, base:base + quarter]
            od = acc[:, base + quarter:base + half]
            o_ref[:, base:base + quarter] = (ev * cos - od * sin).astype(out_dtype)
            o_ref[:, base + quarter:base + half] = (od * cos + ev * sin).astype(out_dtype)
            o_ref[:, base + half:base + head_dim] = (
                acc[:, base + half:base + head_dim].astype(out_dtype))


def tiled_matmul(x, w, b=None, *, tm=256, tn=256, tk=512):
    """out = x @ w.T (+ b); x:[M,K] bf16, w:[N,K] bf16 -> [M,N] bf16."""
    M, K = x.shape
    N = w.shape[0]
    tm = _pick_tile(M, tm, 16)
    tn = _pick_tile(N, tn, 128)
    tk = _pick_tile(K, tk, 128)
    grid = (M // tm, N // tn, K // tk)
    common = dict(
        out_shape=jax.ShapeDtypeStruct((M, N), x.dtype),
        grid=grid,
        out_specs=pl.BlockSpec((tm, tn), lambda i, j, k: (i, j)),
        scratch_shapes=[pltpu.VMEM((tm, tn), jnp.float32)],
        compiler_params=pltpu.CompilerParams(
            dimension_semantics=("parallel", "parallel", "arbitrary")),
    )
    x_spec = pl.BlockSpec((tm, tk), lambda i, j, k: (i, k))
    w_spec = pl.BlockSpec((tn, tk), lambda i, j, k: (j, k))
    if b is None:
        return pl.pallas_call(_matmul_kernel, in_specs=[x_spec, w_spec], **common)(x, w)
    b_spec = pl.BlockSpec((1, tn), lambda i, j, k: (0, j))
    return pl.pallas_call(
        _matmul_bias_kernel, in_specs=[x_spec, w_spec, b_spec], **common
    )(x, w, b.reshape(1, N))


def qk_proj_rope(x, w, b, cos, sin, head_dim, *, tm=256, tn=256, tk=512):
    """Fused QK projection + bias + partial interleaved RoPE (deinterleaved weights)."""
    M, K = x.shape
    N = w.shape[0]
    quarter = head_dim // 4
    align_n = max(128, head_dim)
    assert align_n % head_dim == 0, "head_dim must divide 128 (or be a multiple of it)"
    tm = _pick_tile(M, tm, 16)
    tn = _pick_tile(N, max(tn, align_n), align_n)   # keep tiles head-aligned
    tk = _pick_tile(K, tk, 128)
    grid = (M // tm, N // tn, K // tk)
    return pl.pallas_call(
        functools.partial(_qk_rope_matmul_kernel, head_dim=head_dim),
        out_shape=jax.ShapeDtypeStruct((M, N), x.dtype),
        grid=grid,
        in_specs=[
            pl.BlockSpec((tm, tk), lambda i, j, k: (i, k)),
            pl.BlockSpec((tn, tk), lambda i, j, k: (j, k)),
            pl.BlockSpec((1, tn), lambda i, j, k: (0, j)),
            pl.BlockSpec((tm, quarter), lambda i, j, k: (i, 0)),
            pl.BlockSpec((tm, quarter), lambda i, j, k: (i, 0)),
        ],
        out_specs=pl.BlockSpec((tm, tn), lambda i, j, k: (i, j)),
        scratch_shapes=[pltpu.VMEM((tm, tn), jnp.float32)],
        compiler_params=pltpu.CompilerParams(
            dimension_semantics=("parallel", "parallel", "arbitrary")),
    )(x, w, b.reshape(1, N), cos, sin)


# ----------------------------------------------------------------------------
# Flash attention (causal prefill, GQA) kernel
# ----------------------------------------------------------------------------

def _flash_attn_kernel(q_ref, k_ref, v_ref, o_ref, m_ref, l_ref, acc_ref,
                       *, scale, group, tq, tkv):
    qi = pl.program_id(1)
    ki = pl.program_id(2)

    @pl.when(ki == 0)
    def _init():
        m_ref[...] = jnp.full(m_ref.shape, -jnp.inf, dtype=m_ref.dtype)
        l_ref[...] = jnp.zeros(l_ref.shape, dtype=l_ref.dtype)
        acc_ref[...] = jnp.zeros(acc_ref.shape, dtype=acc_ref.dtype)

    q_start = qi * tq
    k_start = ki * tkv

    # Skip KV blocks that lie entirely above the causal diagonal.
    @pl.when(k_start < q_start + tq)
    def _compute():
        k = k_ref[0]                                    # (tkv, D) bf16
        v = v_ref[0]                                    # (tkv, D) bf16
        row = q_start + lax.broadcasted_iota(jnp.int32, (tq, tkv), 0)
        col = k_start + lax.broadcasted_iota(jnp.int32, (tq, tkv), 1)
        causal = col <= row
        for g in range(group):                          # static unroll over the GQA group
            q = q_ref[g]                                # (tq, D) bf16
            s = lax.dot_general(q, k, _CONTRACT_LAST,
                                preferred_element_type=jnp.float32)
            s = jnp.where(causal, s * scale, -jnp.inf)  # (tq, tkv) f32
            m_prev = m_ref[g]
            m_new = jnp.maximum(m_prev, jnp.max(s, axis=-1, keepdims=True))
            alpha = jnp.exp(m_prev - m_new)
            p = jnp.exp(s - m_new)
            l_ref[g] = alpha * l_ref[g] + jnp.sum(p, axis=-1, keepdims=True)
            pv = lax.dot_general(p.astype(v.dtype), v, (((1,), (0,)), ((), ())),
                                 preferred_element_type=jnp.float32)
            acc_ref[g] = alpha * acc_ref[g] + pv
            m_ref[g] = m_new

    @pl.when(ki == pl.num_programs(2) - 1)
    def _flush():
        for g in range(group):
            inv_l = pl.reciprocal(l_ref[g], approx=True)
            o_ref[g] = (acc_ref[g] * inv_l).astype(o_ref.dtype)


def flash_attention(q, k, v, *, tq=256, tkv=512):
    """q: [nH, S, D]; k, v: [nKV, S, D] -> [nH, S, D]  (causal prefill, GQA)."""
    n_h, S, D = q.shape
    n_kv = k.shape[0]
    assert n_h % n_kv == 0
    group = n_h // n_kv
    tq = _pick_tile(S, tq, 16)
    tkv = _pick_tile(S, tkv, 16)
    grid = (n_kv, S // tq, S // tkv)
    scale = 1.0 / math.sqrt(D)
    return pl.pallas_call(
        functools.partial(_flash_attn_kernel, scale=scale, group=group, tq=tq, tkv=tkv),
        out_shape=jax.ShapeDtypeStruct((n_h, S, D), q.dtype),
        grid=grid,
        in_specs=[
            pl.BlockSpec((group, tq, D), lambda kv, qi, ki: (kv, qi, 0)),
            pl.BlockSpec((1, tkv, D), lambda kv, qi, ki: (kv, ki, 0)),
            pl.BlockSpec((1, tkv, D), lambda kv, qi, ki: (kv, ki, 0)),
        ],
        out_specs=pl.BlockSpec((group, tq, D), lambda kv, qi, ki: (kv, qi, 0)),
        scratch_shapes=[
            pltpu.VMEM((group, tq, 1), jnp.float32),   # running max
            pltpu.VMEM((group, tq, 1), jnp.float32),   # running denominator
            pltpu.VMEM((group, tq, D), jnp.float32),   # output accumulator
        ],
        compiler_params=pltpu.CompilerParams(
            dimension_semantics=("parallel", "parallel", "arbitrary")),
    )(q, k, v)


# ----------------------------------------------------------------------------
# Weight preparation & RoPE tables (plain JAX, one-time / tiny glue)
# ----------------------------------------------------------------------------

def _deinterleave_rope_rows(w, n_heads, head_dim):
    """Reorder per-head output features of a qkv weight/bias from interleaved
    (e0,o0,e1,o1,...) to (evens..., odds...) within the rotary half of each head.

    Exact: softmax(QK^T) is invariant to the same per-head feature permutation
    applied to both Q and K, so no re-interleave is ever needed downstream.
    """
    half = head_dim // 2
    tail = w.shape[1:]
    wh = w.reshape((n_heads, head_dim) + tail)
    rope = wh[:, :half].reshape((n_heads, half // 2, 2) + tail)
    rope = jnp.swapaxes(rope, 1, 2).reshape((n_heads, half) + tail)
    return jnp.concatenate([rope, wh[:, half:]], axis=1).reshape(w.shape)


def prepare_params(w_qkv, b_qkv, w_o, n_heads, n_kv_heads, head_dim):
    """Split the fused qkv weight into (QK, V) and deinterleave the QK rope rows."""
    n_qk = (n_heads + n_kv_heads) * head_dim
    w_qk, w_v = w_qkv[:n_qk], w_qkv[n_qk:]
    b_qk, b_v = b_qkv[:n_qk], b_qkv[n_qk:]
    w_qk = _deinterleave_rope_rows(w_qk, n_heads + n_kv_heads, head_dim)
    b_qk = _deinterleave_rope_rows(b_qk, n_heads + n_kv_heads, head_dim)
    return dict(w_qk=w_qk, b_qk=b_qk, w_v=w_v, b_v=b_v, w_o=w_o)


def rope_tables(position_ids, head_dim, base):
    """cos/sin of shape [num_tokens, head_dim//4] (lmdeploy: dim = rotary_dim // 2)."""
    half = head_dim // 2
    inv_freq = 1.0 / (base ** (jnp.arange(0, half, 2, dtype=jnp.float32) / half))
    ang = position_ids.astype(jnp.float32)[:, None] * inv_freq[None, :]
    return jnp.cos(ang), jnp.sin(ang)


# ----------------------------------------------------------------------------
# SelfAttention forward (prefill, no KV cache)
# ----------------------------------------------------------------------------

def self_attention_forward(hidden_states, position_ids, params, *,
                           num_heads, num_kv_heads, head_dim, rope_base):
    B, S, H = hidden_states.shape
    assert B == 1  # TODO(synk): batched / paged decode path not implemented
    D = head_dim
    x = hidden_states.reshape(S, H)
    cos, sin = rope_tables(position_ids.reshape(-1), D, rope_base)

    # Q/K projection with bias + fused partial RoPE; V projection with bias.
    qk = qk_proj_rope(x, params["w_qk"], params["b_qk"], cos, sin, D)   # [S,(nH+nKV)*D]
    v = tiled_matmul(x, params["w_v"], params["b_v"])                   # [S, nKV*D]

    q = qk[:, :num_heads * D].reshape(S, num_heads, D).transpose(1, 0, 2)
    k = qk[:, num_heads * D:].reshape(S, num_kv_heads, D).transpose(1, 0, 2)
    vh = v.reshape(S, num_kv_heads, D).transpose(1, 0, 2)

    attn = flash_attention(q, k, vh)                                    # [nH, S, D]
    attn = attn.transpose(1, 0, 2).reshape(S, num_heads * D)
    out = tiled_matmul(attn, params["w_o"])                             # [S, H]
    return out.reshape(B, S, H)


# ----------------------------------------------------------------------------
# Pure-JAX reference (faithful to the PyTorch module, original weights)
# ----------------------------------------------------------------------------

def reference_self_attention(hidden_states, w_qkv, b_qkv, w_o, position_ids, *,
                             num_heads, num_kv_heads, head_dim, rope_base):
    B, S, H = hidden_states.shape
    D, half, quarter = head_dim, head_dim // 2, head_dim // 4
    x = hidden_states.reshape(S, H).astype(jnp.float32)
    qkv = x @ w_qkv.astype(jnp.float32).T + b_qkv.astype(jnp.float32)
    q = qkv[:, :num_heads * D].reshape(S, num_heads, D)
    k = qkv[:, num_heads * D:(num_heads + num_kv_heads) * D].reshape(S, num_kv_heads, D)
    v = qkv[:, (num_heads + num_kv_heads) * D:].reshape(S, num_kv_heads, D)

    inv_freq = 1.0 / (rope_base ** (jnp.arange(0, half, 2, dtype=jnp.float32) / half))
    ang = position_ids.reshape(-1).astype(jnp.float32)[:, None] * inv_freq[None, :]
    emb = jnp.concatenate([ang, ang], axis=-1)           # [S, half]
    cos = jnp.cos(emb)[:, None, :]
    sin = jnp.sin(emb)[:, None, :]

    def extract(t):                                      # SelfAttention._extract_rope
        r = t[..., :half].reshape(S, -1, half // 2, 2)
        return jnp.swapaxes(r, -1, -2).reshape(S, -1, half)

    def fill(t, r):                                      # SelfAttention._fill_rope
        r = r.reshape(S, -1, 2, half // 2)
        r = jnp.swapaxes(r, -1, -2).reshape(S, -1, half)
        return jnp.concatenate([r, t[..., half:]], axis=-1)

    def rot_half(r):
        r1, r2 = r[..., :quarter], r[..., quarter:]
        return jnp.concatenate([-r2, r1], axis=-1)

    q_r, k_r = extract(q), extract(k)
    q_r = q_r * cos + rot_half(q_r) * sin
    k_r = k_r * cos + rot_half(k_r) * sin
    q, k = fill(q, q_r), fill(k, k_r)

    group = num_heads // num_kv_heads
    qh = q.transpose(1, 0, 2)
    kh = jnp.repeat(k.transpose(1, 0, 2), group, axis=0)
    vh = jnp.repeat(v.transpose(1, 0, 2), group, axis=0)
    s = jnp.einsum("hqd,hkd->hqk", qh, kh) * (1.0 / math.sqrt(D))
    mask = jnp.tril(jnp.ones((S, S), dtype=bool))
    s = jnp.where(mask[None], s, -jnp.inf)
    p = jax.nn.softmax(s, axis=-1)
    o = jnp.einsum("hqk,hkd->hqd", p, vh)
    o = o.transpose(1, 0, 2).reshape(S, num_heads * D)
    return (o @ w_o.astype(jnp.float32).T).reshape(B, S, H)


# ----------------------------------------------------------------------------
# Main
# ----------------------------------------------------------------------------

if __name__ == "__main__":
    # Small ChatGLM2-like SelfAttention config.
    B, S = 1, 8
    hidden_size = 64
    num_heads = 4
    num_kv_heads = 2
    head_dim = 16            # kv_channels
    rope_ratio = 1.0
    rope_base = 10000.0 * rope_ratio
    n_qkv = (num_heads + 2 * num_kv_heads) * head_dim

    root = jax.random.PRNGKey(0)
    k1, k2, k3, k4 = jax.random.split(root, 4)
    w_qkv = (jax.random.normal(k1, (n_qkv, hidden_size), jnp.float32)
             / math.sqrt(hidden_size)).astype(jnp.bfloat16)
    b_qkv = (jax.random.normal(k2, (n_qkv,), jnp.float32) * 0.1).astype(jnp.bfloat16)
    w_o = (jax.random.normal(k3, (hidden_size, num_heads * head_dim), jnp.float32)
           / math.sqrt(num_heads * head_dim)).astype(jnp.bfloat16)
    hidden_states = jax.random.normal(k4, (B, S, hidden_size), jnp.float32).astype(jnp.bfloat16)
    position_ids = jnp.arange(S, dtype=jnp.int32)[None, :]

    params = prepare_params(w_qkv, b_qkv, w_o, num_heads, num_kv_heads, head_dim)

    fwd = jax.jit(functools.partial(
        self_attention_forward,
        num_heads=num_heads, num_kv_heads=num_kv_heads,
        head_dim=head_dim, rope_base=rope_base))
    out = fwd(hidden_states, position_ids, params)
    jax.block_until_ready(out)
    assert out.shape == (B, S, hidden_size)

    ref = reference_self_attention(
        hidden_states, w_qkv, b_qkv, w_o, position_ids,
        num_heads=num_heads, num_kv_heads=num_kv_heads,
        head_dim=head_dim, rope_base=rope_base)
    np.testing.assert_allclose(
        np.asarray(out.astype(jnp.float32)), np.asarray(ref),
        rtol=3e-2, atol=3e-2)

    print("KERNEL_OK")
</pallas_src>

<mosaic_0001>
module attributes {stable_mosaic.version = 11 : i64} {
  func.func @_matmul_bias_kernel(%arg0: i32, %arg1: i32, %arg2: i32, %arg3: memref<8x64xbf16, #tpu.memory_space<vmem>>, %arg4: memref<32x64xbf16, #tpu.memory_space<vmem>>, %arg5: memref<1x32xbf16, #tpu.memory_space<vmem>>, %arg6: memref<8x32xbf16, #tpu.memory_space<vmem>>, %arg7: memref<8x32xf32, #tpu.memory_space<vmem>>) attributes {dimension_semantics = [#tpu.dimension_semantics<parallel>, #tpu.dimension_semantics<parallel>, #tpu.dimension_semantics<arbitrary>], iteration_bounds = array<i64: 1, 1, 1>, scalar_prefetch = 0 : i64, scratch_operands = 1 : i64, tpu.core_type = #tpu.core_type<tc>, window_params = [{transform_indices = @transform_0, window_bounds = array<i64: 8, 64>}, {transform_indices = @transform_1, window_bounds = array<i64: 32, 64>}, {transform_indices = @transform_2, window_bounds = array<i64: 1, 32>}, {transform_indices = @transform_3, window_bounds = array<i64: 8, 32>}]} {
    %c0_i32 = arith.constant 0 : i32
    %0 = arith.cmpi eq, %arg2, %c0_i32 : i32
    %1 = arith.extui %0 : i1 to i32
    %c0_i32_0 = arith.constant 0 : i32
    %2 = arith.cmpi ne, %1, %c0_i32_0 : i32
    scf.if %2 {
      %cst_10 = arith.constant 0.000000e+00 : f32
      %12 = vector.broadcast %cst_10 : f32 to vector<8x32xf32>
      %c0_11 = arith.constant 0 : index
      %c0_12 = arith.constant 0 : index
      %13 = vector.load %arg7[%c0_11, %c0_12] : memref<8x32xf32, #tpu.memory_space<vmem>>, vector<8x32xf32>
      tpu.vector_store %arg7[%c0_11, %c0_12], %12 {strides = array<i32>} : memref<8x32xf32, #tpu.memory_space<vmem>>, vector<8x32xf32>,
    } else {
    }
    %c0 = arith.constant 0 : index
    %c0_1 = arith.constant 0 : index
    %3 = vector.load %arg7[%c0, %c0_1] : memref<8x32xf32, #tpu.memory_space<vmem>>, vector<8x32xf32>
    %c0_2 = arith.constant 0 : index
    %c0_3 = arith.constant 0 : index
    %4 = vector.load %arg3[%c0_2, %c0_3] : memref<8x64xbf16, #tpu.memory_space<vmem>>, vector<8x64xbf16>
    %c0_4 = arith.constant 0 : index
    %c0_5 = arith.constant 0 : index
    %5 = vector.load %arg4[%c0_4, %c0_5] : memref<32x64xbf16, #tpu.memory_space<vmem>>, vector<32x64xbf16>
    %cst = arith.constant dense<0.000000e+00> : vector<8x32xf32>
    %6 = tpu.matmul %4, %5, %cst {dimension_numbers = #tpu.dot_dimension_numbers<[1], [1], [0], [0], [0, 0, 1, 0], [], []>} : vector<8x64xbf16>, vector<32x64xbf16>, vector<8x32xf32> -> vector<8x32xf32>
    %7 = arith.addf %3, %6 : vector<8x32xf32>
    %c0_6 = arith.constant 0 : index
    %c0_7 = arith.constant 0 : index
    %8 = vector.load %arg7[%c0_6, %c0_7] : memref<8x32xf32, #tpu.memory_space<vmem>>, vector<8x32xf32>
    tpu.vector_store %arg7[%c0_6, %c0_7], %7 {strides = array<i32>} : memref<8x32xf32, #tpu.memory_space<vmem>>, vector<8x32xf32>,
    %c0_i32_8 = arith.constant 0 : i32
    %9 = arith.cmpi eq, %arg2, %c0_i32_8 : i32
    %10 = arith.extui %9 : i1 to i32
    %c0_i32_9 = arith.constant 0 : i32
    %11 = arith.cmpi ne, %10, %c0_i32_9 : i32
    scf.if %11 {
      %c0_10 = arith.constant 0 : index
      %c0_11 = arith.constant 0 : index
      %12 = vector.load %arg7[%c0_10, %c0_11] : memref<8x32xf32, #tpu.memory_space<vmem>>, vector<8x32xf32>
      %c0_12 = arith.constant 0 : index
      %c0_13 = arith.constant 0 : index
      %13 = vector.load %arg5[%c0_12, %c0_13] : memref<1x32xbf16, #tpu.memory_space<vmem>>, vector<1x32xbf16>
      %14 = arith.extf %13 : vector<1x32xbf16> to vector<1x32xf32>
      %15 = vector.broadcast %14 : vector<1x32xf32> to vector<8x32xf32>
      %16 = arith.addf %12, %15 : vector<8x32xf32>
      %17 = arith.truncf %16 : vector<8x32xf32> to vector<8x32xbf16>
      %c0_14 = arith.constant 0 : index
      %c0_15 = arith.constant 0 : index
      %18 = vector.load %arg6[%c0_14, %c0_15] : memref<8x32xbf16, #tpu.memory_space<vmem>>, vector<8x32xbf16>
      tpu.vector_store %arg6[%c0_14, %c0_15], %17 {strides = array<i32>} : memref<8x32xbf16, #tpu.memory_space<vmem>>, vector<8x32xbf16>,
    } else {
    }
    return
  }
  func.func @transform_0(%arg0: i32, %arg1: i32, %arg2: i32) -> (i32, i32) {
    %c0_i32 = arith.constant 0 : i32
    return %arg0, %arg2 : i32, i32
  }
  func.func @transform_1(%arg0: i32, %arg1: i32, %arg2: i32) -> (i32, i32) {
    %c0_i32 = arith.constant 0 : i32
    return %arg1, %arg2 : i32, i32
  }
  func.func @transform_2(%arg0: i32, %arg1: i32, %arg2: i32) -> (i32, i32) {
    %c0_i32 = arith.constant 0 : i32
    %c0_i32_0 = arith.constant 0 : i32
    return %c0_i32, %arg1 : i32, i32
  }
  func.func @transform_3(%arg0: i32, %arg1: i32, %arg2: i32) -> (i32, i32) {
    %c0_i32 = arith.constant 0 : i32
    return %arg0, %arg1 : i32, i32
  }
}

module attributes {stable_mosaic.version = 11 : i64} {
  func.func @_qk_rope_matmul_kernel(%arg0: i32, %arg1: i32, %arg2: i32, %arg3: memref<8x64xbf16, #tpu.memory_space<vmem>>, %arg4: memref<96x64xbf16, #tpu.memory_space<vmem>>, %arg5: memref<1x96xbf16, #tpu.memory_space<vmem>>, %arg6: memref<8x4xf32, #tpu.memory_space<vmem>>, %arg7: memref<8x4xf32, #tpu.memory_space<vmem>>, %arg8: memref<8x96xbf16, #tpu.memory_space<vmem>>, %arg9: memref<8x96xf32, #tpu.memory_space<vmem>>) attributes {dimension_semantics = [#tpu.dimension_semantics<parallel>, #tpu.dimension_semantics<parallel>, #tpu.dimension_semantics<arbitrary>], iteration_bounds = array<i64: 1, 1, 1>, scalar_prefetch = 0 : i64, scratch_operands = 1 : i64, tpu.core_type = #tpu.core_type<tc>, window_params = [{transform_indices = @transform_0, window_bounds = array<i64: 8, 64>}, {transform_indices = @transform_1, window_bounds = array<i64: 96, 64>}, {transform_indices = @transform_2, window_bounds = array<i64: 1, 96>}, {transform_indices = @transform_3, window_bounds = array<i64: 8, 4>}, {transform_indices = @transform_4, window_bounds = array<i64: 8, 4>}, {transform_indices = @transform_5, window_bounds = array<i64: 8, 96>}]} {
    %c0_i32 = arith.constant 0 : i32
    %0 = arith.cmpi eq, %arg2, %c0_i32 : i32
    %1 = arith.extui %0 : i1 to i32
    %c0_i32_0 = arith.constant 0 : i32
    %2 = arith.cmpi ne, %1, %c0_i32_0 : i32
    scf.if %2 {
      %cst_10 = arith.constant 0.000000e+00 : f32
      %12 = vector.broadcast %cst_10 : f32 to vector<8x96xf32>
      %c0_11 = arith.constant 0 : index
      %c0_12 = arith.constant 0 : index
      %13 = vector.load %arg9[%c0_11, %c0_12] : memref<8x96xf32, #tpu.memory_space<vmem>>, vector<8x96xf32>
      tpu.vector_store %arg9[%c0_11, %c0_12], %12 {strides = array<i32>} : memref<8x96xf32, #tpu.memory_space<vmem>>, vector<8x96xf32>,
    } else {
    }
    %c0 = arith.constant 0 : index
    %c0_1 = arith.constant 0 : index
    %3 = vector.load %arg9[%c0, %c0_1] : memref<8x96xf32, #tpu.memory_space<vmem>>, vector<8x96xf32>
    %c0_2 = arith.constant 0 : index
    %c0_3 = arith.constant 0 : index
    %4 = vector.load %arg3[%c0_2, %c0_3] : memref<8x64xbf16, #tpu.memory_space<vmem>>, vector<8x64xbf16>
    %c0_4 = arith.constant 0 : index
    %c0_5 = arith.constant 0 : index
    %5 = vector.load %arg4[%c0_4, %c0_5] : memref<96x64xbf16, #tpu.memory_space<vmem>>, vector<96x64xbf16>
    %cst = arith.constant dense<0.000000e+00> : vector<8x96xf32>
    %6 = tpu.matmul %4, %5, %cst {dimension_numbers = #tpu.dot_dimension_numbers<[1], [1], [0], [0], [0, 0, 1, 0], [], []>} : vector<8x64xbf16>, vector<96x64xbf16>, vector<8x96xf32> -> vector<8x96xf32>
    %7 = arith.addf %3, %6 : vector<8x96xf32>
    %c0_6 = arith.constant 0 : index
    %c0_7 = arith.constant 0 : index
    %8 = vector.load %arg9[%c0_6, %c0_7] : memref<8x96xf32, #tpu.memory_space<vmem>>, vector<8x96xf32>
    tpu.vector_store %arg9[%c0_6, %c0_7], %7 {strides = array<i32>} : memref<8x96xf32, #tpu.memory_space<vmem>>, vector<8x96xf32>,
    %c0_i32_8 = arith.constant 0 : i32
    %9 = arith.cmpi eq, %arg2, %c0_i32_8 : i32
    %10 = arith.extui %9 : i1 to i32
    %c0_i32_9 = arith.constant 0 : i32
    %11 = arith.cmpi ne, %10, %c0_i32_9 : i32
    scf.if %11 {
      %c0_10 = arith.constant 0 : index
      %c0_11 = arith.constant 0 : index
      %12 = vector.load %arg9[%c0_10, %c0_11] : memref<8x96xf32, #tpu.memory_space<vmem>>, vector<8x96xf32>
      %c0_12 = arith.constant 0 : index
      %c0_13 = arith.constant 0 : index
      %13 = vector.load %arg5[%c0_12, %c0_13] : memref<1x96xbf16, #tpu.memory_space<vmem>>, vector<1x96xbf16>
      %14 = arith.extf %13 : vector<1x96xbf16> to vector<1x96xf32>
      %15 = vector.broadcast %14 : vector<1x96xf32> to vector<8x96xf32>
      %16 = arith.addf %12, %15 : vector<8x96xf32>
      %c0_14 = arith.constant 0 : index
      %c0_15 = arith.constant 0 : index
      %17 = vector.load %arg6[%c0_14, %c0_15] : memref<8x4xf32, #tpu.memory_space<vmem>>, vector<8x4xf32>
      %c0_16 = arith.constant 0 : index
      %c0_17 = arith.constant 0 : index
      %18 = vector.load %arg7[%c0_16, %c0_17] : memref<8x4xf32, #tpu.memory_space<vmem>>, vector<8x4xf32>
      %19 = vector.extract_strided_slice %16 {offsets = [0, 0], sizes = [8, 4], strides = [1, 1]} : vector<8x96xf32> to vector<8x4xf32>
      %20 = vector.extract_strided_slice %16 {offsets = [0, 4], sizes = [8, 4], strides = [1, 1]} : vector<8x96xf32> to vector<8x4xf32>
      %21 = arith.mulf %19, %17 : vector<8x4xf32>
      %22 = arith.mulf %20, %18 : vector<8x4xf32>
      %23 = arith.subf %21, %22 : vector<8x4xf32>
      %24 = arith.truncf %23 : vector<8x4xf32> to vector<8x4xbf16>
      %c0_18 = arith.constant 0 : index
      %c0_19 = arith.constant 0 : index
      %25 = vector.load %arg8[%c0_18, %c0_19] : memref<8x96xbf16, #tpu.memory_space<vmem>>, vector<8x4xbf16>
      tpu.vector_store %arg8[%c0_18, %c0_19], %24 {strides = array<i32>} : memref<8x96xbf16, #tpu.memory_space<vmem>>, vector<8x4xbf16>,
      %26 = arith.mulf %20, %17 : vector<8x4xf32>
      %27 = arith.mulf %19, %18 : vector<8x4xf32>
      %28 = arith.addf %26, %27 : vector<8x4xf32>
      %29 = arith.truncf %28 : vector<8x4xf32> to vector<8x4xbf16>
      %c0_20 = arith.constant 0 : index
      %c4 = arith.constant 4 : index
      %30 = vector.load %arg8[%c0_20, %c4] : memref<8x96xbf16, #tpu.memory_space<vmem>>, vector<8x4xbf16>
      tpu.vector_store %arg8[%c0_20, %c4], %29 {strides = array<i32>} : memref<8x96xbf16, #tpu.memory_space<vmem>>, vector<8x4xbf16>,
      %31 = vector.extract_strided_slice %16 {offsets = [0, 8], sizes = [8, 8], strides = [1, 1]} : vector<8x96xf32> to vector<8x8xf32>
      %32 = arith.truncf %31 : vector<8x8xf32> to vector<8x8xbf16>
      %c0_21 = arith.constant 0 : index
      %c8 = arith.constant 8 : index
      %33 = vector.load %arg8[%c0_21, %c8] : memref<8x96xbf16, #tpu.memory_space<vmem>>, vector<8x8xbf16>
      tpu.vector_store %arg8[%c0_21, %c8], %32 {strides = array<i32>} : memref<8x96xbf16, #tpu.memory_space<vmem>>, vector<8x8xbf16>,
      %34 = vector.extract_strided_slice %16 {offsets = [0, 16], sizes = [8, 4], strides = [1, 1]} : vector<8x96xf32> to vector<8x4xf32>
      %35 = vector.extract_strided_slice %16 {offsets = [0, 20], sizes = [8, 4], strides = [1, 1]} : vector<8x96xf32> to vector<8x4xf32>
      %36 = arith.mulf %34, %17 : vector<8x4xf32>
      %37 = arith.mulf %35, %18 : vector<8x4xf32>
      %38 = arith.subf %36, %37 : vector<8x4xf32>
      %39 = arith.truncf %38 : vector<8x4xf32> to vector<8x4xbf16>
      %c0_22 = arith.constant 0 : index
      %c16 = arith.constant 16 : index
      %40 = vector.load %arg8[%c0_22, %c16] : memref<8x96xbf16, #tpu.memory_space<vmem>>, vector<8x4xbf16>
      tpu.vector_store %arg8[%c0_22, %c16], %39 {strides = array<i32>} : memref<8x96xbf16, #tpu.memory_space<vmem>>, vector<8x4xbf16>,
      %41 = arith.mulf %35, %17 : vector<8x4xf32>
      %42 = arith.mulf %34, %18 : vector<8x4xf32>
      %43 = arith.addf %41, %42 : vector<8x4xf32>
      %44 = arith.truncf %43 : vector<8x4xf32> to vector<8x4xbf16>
      %c0_23 = arith.constant 0 : index
      %c20 = arith.constant 20 : index
      %45 = vector.load %arg8[%c0_23, %c20] : memref<8x96xbf16, #tpu.memory_space<vmem>>, vector<8x4xbf16>
      tpu.vector_store %arg8[%c0_23, %c20], %44 {strides = array<i32>} : memref<8x96xbf16, #tpu.memory_space<vmem>>, vector<8x4xbf16>,
      %46 = vector.extract_strided_slice %16 {offsets = [0, 24], sizes = [8, 8], strides = [1, 1]} : vector<8x96xf32> to vector<8x8xf32>
      %47 = arith.truncf %46 : vector<8x8xf32> to vector<8x8xbf16>
      %c0_24 = arith.constant 0 : index
      %c24 = arith.constant 24 : index
      %48 = vector.load %arg8[%c0_24, %c24] : memref<8x96xbf16, #tpu.memory_space<vmem>>, vector<8x8xbf16>
      tpu.vector_store %arg8[%c0_24, %c24], %47 {strides = array<i32>} : memref<8x96xbf16, #tpu.memory_space<vmem>>, vector<8x8xbf16>,
      %49 = vector.extract_strided_slice %16 {offsets = [0, 32], sizes = [8, 4], strides = [1, 1]} : vector<8x96xf32> to vector<8x4xf32>
      %50 = vector.extract_strided_slice %16 {offsets = [0, 36], sizes = [8, 4], strides = [1, 1]} : vector<8x96xf32> to vector<8x4xf32>
      %51 = arith.mulf %49, %17 : vector<8x4xf32>
      %52 = arith.mulf %50, %18 : vector<8x4xf32>
      %53 = arith.subf %51, %52 : vector<8x4xf32>
      %54 = arith.truncf %53 : vector<8x4xf32> to vector<8x4xbf16>
      %c0_25 = arith.constant 0 : index
      %c32 = arith.constant 32 : index
      %55 = vector.load %arg8[%c0_25, %c32] : memref<8x96xbf16, #tpu.memory_space<vmem>>, vector<8x4xbf16>
      tpu.vector_store %arg8[%c0_25, %c32], %54 {strides = array<i32>} : memref<8x96xbf16, #tpu.memory_space<vmem>>, vector<8x4xbf16>,
      %56 = arith.mulf %50, %17 : vector<8x4xf32>
      %57 = arith.mulf %49, %18 : vector<8x4xf32>
      %58 = arith.addf %56, %57 : vector<8x4xf32>
      %59 = arith.truncf %58 : vector<8x4xf32> to vector<8x4xbf16>
      %c0_26 = arith.constant 0 : index
      %c36 = arith.constant 36 : index
      %60 = vector.load %arg8[%c0_26, %c36] : memref<8x96xbf16, #tpu.memory_space<vmem>>, vector<8x4xbf16>
      tpu.vector_store %arg8[%c0_26, %c36], %59 {strides = array<i32>} : memref<8x96xbf16, #tpu.memory_space<vmem>>, vector<8x4xbf16>,
      %61 = vector.extract_strided_slice %16 {offsets = [0, 40], sizes = [8, 8], strides = [1, 1]} : vector<8x96xf32> to vector<8x8xf32>
      %62 = arith.truncf %61 : vector<8x8xf32> to vector<8x8xbf16>
      %c0_27 = arith.constant 0 : index
      %c40 = arith.constant 40 : index
      %63 = vector.load %arg8[%c0_27, %c40] : memref<8x96xbf16, #tpu.memory_space<vmem>>, vector<8x8xbf16>
      tpu.vector_store %arg8[%c0_27, %c40], %62 {strides = array<i32>} : memref<8x96xbf16, #tpu.memory_space<vmem>>, vector<8x8xbf16>,
      %64 = vector.extract_strided_slice %16 {offsets = [0, 48], sizes = [8, 4], strides = [1, 1]} : vector<8x96xf32> to vector<8x4xf32>
      %65 = vector.extract_strided_slice %16 {offsets = [0, 52], sizes = [8, 4], strides = [1, 1]} : vector<8x96xf32> to vector<8x4xf32>
      %66 = arith.mulf %64, %17 : vector<8x4xf32>
      %67 = arith.mulf %65, %18 : vector<8x4xf32>
      %68 = arith.subf %66, %67 : vector<8x4xf32>
      %69 = arith.truncf %68 : vector<8x4xf32> to vector<8x4xbf16>
      %c0_28 = arith.constant 0 : index
      %c48 = arith.constant 48 : index
      %70 = vector.load %arg8[%c0_28, %c48] : memref<8x96xbf16, #tpu.memory_space<vmem>>, vector<8x4xbf16>
      tpu.vector_store %arg8[%c0_28, %c48], %69 {strides = array<i32>} : memref<8x96xbf16, #tpu.memory_space<vmem>>, vector<8x4xbf16>,
      %71 = arith.mulf %65, %17 : vector<8x4xf32>
      %72 = arith.mulf %64, %18 : vector<8x4xf32>
      %73 = arith.addf %71, %72 : vector<8x4xf32>
      %74 = arith.truncf %73 : vector<8x4xf32> to vector<8x4xbf16>
      %c0_29 = arith.constant 0 : index
      %c52 = arith.constant 52 : index
      %75 = vector.load %arg8[%c0_29, %c52] : memref<8x96xbf16, #tpu.memory_space<vmem>>, vector<8x4xbf16>
      tpu.vector_store %arg8[%c0_29, %c52], %74 {strides = array<i32>} : memref<8x96xbf16, #tpu.memory_space<vmem>>, vector<8x4xbf16>,
      %76 = vector.extract_strided_slice %16 {offsets = [0, 56], sizes = [8, 8], strides = [1, 1]} : vector<8x96xf32> to vector<8x8xf32>
      %77 = arith.truncf %76 : vector<8x8xf32> to vector<8x8xbf16>
      %c0_30 = arith.constant 0 : index
      %c56 = arith.constant 56 : index
      %78 = vector.load %arg8[%c0_30, %c56] : memref<8x96xbf16, #tpu.memory_space<vmem>>, vector<8x8xbf16>
      tpu.vector_store %arg8[%c0_30, %c56], %77 {strides = array<i32>} : memref<8x96xbf16, #tpu.memory_space<vmem>>, vector<8x8xbf16>,
      %79 = vector.extract_strided_slice %16 {offsets = [0, 64], sizes = [8, 4], strides = [1, 1]} : vector<8x96xf32> to vector<8x4xf32>
      %80 = vector.extract_strided_slice %16 {offsets = [0, 68], sizes = [8, 4], strides = [1, 1]} : vector<8x96xf32> to vector<8x4xf32>
      %81 = arith.mulf %79, %17 : vector<8x4xf32>
      %82 = arith.mulf %80, %18 : vector<8x4xf32>
      %83 = arith.subf %81, %82 : vector<8x4xf32>
      %84 = arith.truncf %83 : vector<8x4xf32> to vector<8x4xbf16>
      %c0_31 = arith.constant 0 : index
      %c64 = arith.constant 64 : index
      %85 = vector.load %arg8[%c0_31, %c64] : memref<8x96xbf16, #tpu.memory_space<vmem>>, vector<8x4xbf16>
      tpu.vector_store %arg8[%c0_31, %c64], %84 {strides = array<i32>} : memref<8x96xbf16, #tpu.memory_space<vmem>>, vector<8x4xbf16>,
      %86 = arith.mulf %80, %17 : vector<8x4xf32>
      %87 = arith.mulf %79, %18 : vector<8x4xf32>
      %88 = arith.addf %86, %87 : vector<8x4xf32>
      %89 = arith.truncf %88 : vector<8x4xf32> to vector<8x4xbf16>
      %c0_32 = arith.constant 0 : index
      %c68 = arith.constant 68 : index
      %90 = vector.load %arg8[%c0_32, %c68] : memref<8x96xbf16, #tpu.memory_space<vmem>>, vector<8x4xbf16>
      tpu.vector_store %arg8[%c0_32, %c68], %89 {strides = array<i32>} : memref<8x96xbf16, #tpu.memory_space<vmem>>, vector<8x4xbf16>,
      %91 = vector.extract_strided_slice %16 {offsets = [0, 72], sizes = [8, 8], strides = [1, 1]} : vector<8x96xf32> to vector<8x8xf32>
      %92 = arith.truncf %91 : vector<8x8xf32> to vector<8x8xbf16>
      %c0_33 = arith.constant 0 : index
      %c72 = arith.constant 72 : index
      %93 = vector.load %arg8[%c0_33, %c72] : memref<8x96xbf16, #tpu.memory_space<vmem>>, vector<8x8xbf16>
      tpu.vector_store %arg8[%c0_33, %c72], %92 {strides = array<i32>} : memref<8x96xbf16, #tpu.memory_space<vmem>>, vector<8x8xbf16>,
      %94 = vector.extract_strided_slice %16 {offsets = [0, 80], sizes = [8, 4], strides = [1, 1]} : vector<8x96xf32> to vector<8x4xf32>
      %95 = vector.extract_strided_slice %16 {offsets = [0, 84], sizes = [8, 4], strides = [1, 1]} : vector<8x96xf32> to vector<8x4xf32>
      %96 = arith.mulf %94, %17 : vector<8x4xf32>
      %97 = arith.mulf %95, %18 : vector<8x4xf32>
      %98 = arith.subf %96, %97 : vector<8x4xf32>
      %99 = arith.truncf %98 : vector<8x4xf32> to vector<8x4xbf16>
      %c0_34 = arith.constant 0 : index
      %c80 = arith.constant 80 : index
      %100 = vector.load %arg8[%c0_34, %c80] : memref<8x96xbf16, #tpu.memory_space<vmem>>, vector<8x4xbf16>
      tpu.vector_store %arg8[%c0_34, %c80], %99 {strides = array<i32>} : memref<8x96xbf16, #tpu.memory_space<vmem>>, vector<8x4xbf16>,
      %101 = arith.mulf %95, %17 : vector<8x4xf32>
      %102 = arith.mulf %94, %18 : vector<8x4xf32>
      %103 = arith.addf %101, %102 : vector<8x4xf32>
      %104 = arith.truncf %103 : vector<8x4xf32> to vector<8x4xbf16>
      %c0_35 = arith.constant 0 : index
      %c84 = arith.constant 84 : index
      %105 = vector.load %arg8[%c0_35, %c84] : memref<8x96xbf16, #tpu.memory_space<vmem>>, vector<8x4xbf16>
      tpu.vector_store %arg8[%c0_35, %c84], %104 {strides = array<i32>} : memref<8x96xbf16, #tpu.memory_space<vmem>>, vector<8x4xbf16>,
      %106 = vector.extract_strided_slice %16 {offsets = [0, 88], sizes = [8, 8], strides = [1, 1]} : vector<8x96xf32> to vector<8x8xf32>
      %107 = arith.truncf %106 : vector<8x8xf32> to vector<8x8xbf16>
      %c0_36 = arith.constant 0 : index
      %c88 = arith.constant 88 : index
      %108 = vector.load %arg8[%c0_36, %c88] : memref<8x96xbf16, #tpu.memory_space<vmem>>, vector<8x8xbf16>
      tpu.vector_store %arg8[%c0_36, %c88], %107 {strides = array<i32>} : memref<8x96xbf16, #tpu.memory_space<vmem>>, vector<8x8xbf16>,
    } else {
    }
    return
  }
  func.func @transform_0(%arg0: i32, %arg1: i32, %arg2: i32) -> (i32, i32) {
    %c0_i32 = arith.constant 0 : i32
    return %arg0, %arg2 : i32, i32
  }
  func.func @transform_1(%arg0: i32, %arg1: i32, %arg2: i32) -> (i32, i32) {
    %c0_i32 = arith.constant 0 : i32
    return %arg1, %arg2 : i32, i32
  }
  func.func @transform_2(%arg0: i32, %arg1: i32, %arg2: i32) -> (i32, i32) {
    %c0_i32 = arith.constant 0 : i32
    %c0_i32_0 = arith.constant 0 : i32
    return %c0_i32, %arg1 : i32, i32
  }
  func.func @transform_3(%arg0: i32, %arg1: i32, %arg2: i32) -> (i32, i32) {
    %c0_i32 = arith.constant 0 : i32
    %c0_i32_0 = arith.constant 0 : i32
    return %arg0, %c0_i32 : i32, i32
  }
  func.func @transform_4(%arg0: i32, %arg1: i32, %arg2: i32) -> (i32, i32) {
    %c0_i32 = arith.constant 0 : i32
    %c0_i32_0 = arith.constant 0 : i32
    return %arg0, %c0_i32 : i32, i32
  }
  func.func @transform_5(%arg0: i32, %arg1: i32, %arg2: i32) -> (i32, i32) {
    %c0_i32 = arith.constant 0 : i32
    return %arg0, %arg1 : i32, i32
  }
}

module attributes {stable_mosaic.version = 11 : i64} {
  func.func @_flash_attn_kernel(%arg0: i32, %arg1: i32, %arg2: i32, %arg3: memref<2x8x16xbf16, #tpu.memory_space<vmem>>, %arg4: memref<1x8x16xbf16, #tpu.memory_space<vmem>>, %arg5: memref<1x8x16xbf16, #tpu.memory_space<vmem>>, %arg6: memref<2x8x16xbf16, #tpu.memory_space<vmem>>, %arg7: memref<2x8x1xf32, #tpu.memory_space<vmem>>, %arg8: memref<2x8x1xf32, #tpu.memory_space<vmem>>, %arg9: memref<2x8x16xf32, #tpu.memory_space<vmem>>) attributes {dimension_semantics = [#tpu.dimension_semantics<parallel>, #tpu.dimension_semantics<parallel>, #tpu.dimension_semantics<arbitrary>], iteration_bounds = array<i64: 2, 1, 1>, scalar_prefetch = 0 : i64, scratch_operands = 3 : i64, tpu.core_type = #tpu.core_type<tc>, window_params = [{transform_indices = @transform_0, window_bounds = array<i64: 2, 8, 16>}, {transform_indices = @transform_1, window_bounds = array<i64: 1, 8, 16>}, {transform_indices = @transform_2, window_bounds = array<i64: 1, 8, 16>}, {transform_indices = @transform_3, window_bounds = array<i64: 2, 8, 16>}]} {
    %c0_i32 = arith.constant 0 : i32
    %0 = arith.cmpi eq, %arg2, %c0_i32 : i32
    %1 = arith.extui %0 : i1 to i32
    %c0_i32_0 = arith.constant 0 : i32
    %2 = arith.cmpi ne, %1, %c0_i32_0 : i32
    scf.if %2 {
      %cst = arith.constant 0xFF800000 : f32
      %12 = vector.broadcast %cst : f32 to vector<2x8x1xf32>
      %c0 = arith.constant 0 : index
      %c0_6 = arith.constant 0 : index
      %c0_7 = arith.constant 0 : index
      %13 = vector.load %arg7[%c0, %c0_6, %c0_7] : memref<2x8x1xf32, #tpu.memory_space<vmem>>, vector<2x8x1xf32>
      tpu.vector_store %arg7[%c0, %c0_6, %c0_7], %12 {strides = array<i32>} : memref<2x8x1xf32, #tpu.memory_space<vmem>>, vector<2x8x1xf32>,
      %cst_8 = arith.constant 0.000000e+00 : f32
      %14 = vector.broadcast %cst_8 : f32 to vector<2x8x1xf32>
      %c0_9 = arith.constant 0 : index
      %c0_10 = arith.constant 0 : index
      %c0_11 = arith.constant 0 : index
      %15 = vector.load %arg8[%c0_9, %c0_10, %c0_11] : memref<2x8x1xf32, #tpu.memory_space<vmem>>, vector<2x8x1xf32>
      tpu.vector_store %arg8[%c0_9, %c0_10, %c0_11], %14 {strides = array<i32>} : memref<2x8x1xf32, #tpu.memory_space<vmem>>, vector<2x8x1xf32>,
      %cst_12 = arith.constant 0.000000e+00 : f32
      %16 = vector.broadcast %cst_12 : f32 to vector<2x8x16xf32>
      %c0_13 = arith.constant 0 : index
      %c0_14 = arith.constant 0 : index
      %c0_15 = arith.constant 0 : index
      %17 = vector.load %arg9[%c0_13, %c0_14, %c0_15] : memref<2x8x16xf32, #tpu.memory_space<vmem>>, vector<2x8x16xf32>
      tpu.vector_store %arg9[%c0_13, %c0_14, %c0_15], %16 {strides = array<i32>} : memref<2x8x16xf32, #tpu.memory_space<vmem>>, vector<2x8x16xf32>,
    } else {
    }
    %c8_i32 = arith.constant 8 : i32
    %3 = arith.muli %arg1, %c8_i32 : i32
    %c8_i32_1 = arith.constant 8 : i32
    %4 = arith.muli %arg2, %c8_i32_1 : i32
    %c8_i32_2 = arith.constant 8 : i32
    %5 = arith.addi %3, %c8_i32_2 : i32
    %6 = arith.cmpi slt, %4, %5 : i32
    %7 = arith.extui %6 : i1 to i32
    %c0_i32_3 = arith.constant 0 : i32
    %8 = arith.cmpi ne, %7, %c0_i32_3 : i32
    scf.if %8 {
      %c0 = arith.constant 0 : index
      %c0_6 = arith.constant 0 : index
      %c0_7 = arith.constant 0 : index
      %12 = vector.load %arg4[%c0, %c0_6, %c0_7] : memref<1x8x16xbf16, #tpu.memory_space<vmem>>, vector<1x8x16xbf16>
      %13 = vector.shape_cast %12 : vector<1x8x16xbf16> to vector<8x16xbf16>
      %c0_8 = arith.constant 0 : index
      %c0_9 = arith.constant 0 : index
      %c0_10 = arith.constant 0 : index
      %14 = vector.load %arg5[%c0_8, %c0_9, %c0_10] : memref<1x8x16xbf16, #tpu.memory_space<vmem>>, vector<1x8x16xbf16>
      %15 = vector.shape_cast %14 : vector<1x8x16xbf16> to vector<8x16xbf16>
      %16 = tpu.iota {dimensions = array<i32: 0>} : vector<8x8xi32>
      %17 = vector.broadcast %3 : i32 to vector<8x8xi32>
      %18 = arith.addi %17, %16 : vector<8x8xi32>
      %19 = tpu.iota {dimensions = array<i32: 1>} : vector<8x8xi32>
      %20 = vector.broadcast %4 : i32 to vector<8x8xi32>
      %21 = arith.addi %20, %19 : vector<8x8xi32>
      %22 = arith.cmpi sle, %21, %18 : vector<8x8xi32>
      %c0_11 = arith.constant 0 : index
      %c0_12 = arith.constant 0 : index
      %c0_13 = arith.constant 0 : index
      %23 = vector.load %arg3[%c0_11, %c0_12, %c0_13] : memref<2x8x16xbf16, #tpu.memory_space<vmem>>, vector<1x8x16xbf16>
      %24 = vector.shape_cast %23 : vector<1x8x16xbf16> to vector<8x16xbf16>
      %cst = arith.constant dense<0.000000e+00> : vector<8x8xf32>
      %25 = tpu.matmul %24, %13, %cst {dimension_numbers = #tpu.dot_dimension_numbers<[1], [1], [0], [0], [0, 0, 1, 0], [], []>} : vector<8x16xbf16>, vector<8x16xbf16>, vector<8x8xf32> -> vector<8x8xf32>
      %cst_14 = arith.constant 2.500000e-01 : f32
      %26 = vector.broadcast %cst_14 : f32 to vector<8x8xf32>
      %27 = arith.mulf %25, %26 : vector<8x8xf32>
      %cst_15 = arith.constant 0xFF800000 : f32
      %28 = vector.broadcast %cst_15 : f32 to vector<8x8xf32>
      %29 = arith.select %22, %27, %28 : vector<8x8xi1>, vector<8x8xf32>
      %c0_16 = arith.constant 0 : index
      %c0_17 = arith.constant 0 : index
      %c0_18 = arith.constant 0 : index
      %30 = vector.load %arg7[%c0_16, %c0_17, %c0_18] : memref<2x8x1xf32, #tpu.memory_space<vmem>>, vector<1x8x1xf32>
      %31 = vector.shape_cast %30 : vector<1x8x1xf32> to vector<8x1xf32>
      %cst_19 = arith.constant dense<0xFF800000> : vector<8xf32>
      %32 = vector.multi_reduction <maximumf>, %29, %cst_19 [1] : vector<8x8xf32> to vector<8xf32>
      %33 = vector.shape_cast %32 : vector<8xf32> to vector<8x1xf32>
      %34 = arith.maximumf %31, %33 : vector<8x1xf32>
      %35 = arith.subf %31, %34 : vector<8x1xf32>
      %36 = math.exp %35 : vector<8x1xf32>
      %37 = vector.broadcast %34 : vector<8x1xf32> to vector<8x8xf32>
      %38 = arith.subf %29, %37 : vector<8x8xf32>
      %39 = math.exp %38 : vector<8x8xf32>
      %c0_20 = arith.constant 0 : index
      %c0_21 = arith.constant 0 : index
      %c0_22 = arith.constant 0 : index
      %40 = vector.load %arg8[%c0_20, %c0_21, %c0_22] : memref<2x8x1xf32, #tpu.memory_space<vmem>>, vector<1x8x1xf32>
      %41 = vector.shape_cast %40 : vector<1x8x1xf32> to vector<8x1xf32>
      %42 = arith.mulf %36, %41 : vector<8x1xf32>
      %cst_23 = arith.constant dense<0.000000e+00> : vector<8xf32>
      %43 = vector.multi_reduction <add>, %39, %cst_23 [1] : vector<8x8xf32> to vector<8xf32>
      %44 = vector.shape_cast %43 : vector<8xf32> to vector<8x1xf32>
      %45 = arith.addf %42, %44 : vector<8x1xf32>
      %c0_24 = arith.constant 0 : index
      %c0_25 = arith.constant 0 : index
      %c0_26 = arith.constant 0 : index
      %46 = vector.load %arg8[%c0_24, %c0_25, %c0_26] : memref<2x8x1xf32, #tpu.memory_space<vmem>>, vector<1x8x1xf32>
      %47 = vector.shape_cast %46 : vector<1x8x1xf32> to vector<8x1xf32>
      %48 = vector.shape_cast %45 : vector<8x1xf32> to vector<1x8x1xf32>
      tpu.vector_store %arg8[%c0_24, %c0_25, %c0_26], %48 {strides = array<i32>} : memref<2x8x1xf32, #tpu.memory_space<vmem>>, vector<1x8x1xf32>,
      %49 = arith.truncf %39 : vector<8x8xf32> to vector<8x8xbf16>
      %cst_27 = arith.constant dense<0.000000e+00> : vector<8x16xf32>
      %50 = tpu.matmul %49, %15, %cst_27 {dimension_numbers = #tpu.dot_dimension_numbers<[1], [0], [0], [1], [0, 0, 1, 1], [], []>} : vector<8x8xbf16>, vector<8x16xbf16>, vector<8x16xf32> -> vector<8x16xf32>
      %c0_28 = arith.constant 0 : index
      %c0_29 = arith.constant 0 : index
      %c0_30 = arith.constant 0 : index
      %51 = vector.load %arg9[%c0_28, %c0_29, %c0_30] : memref<2x8x16xf32, #tpu.memory_space<vmem>>, vector<1x8x16xf32>
      %52 = vector.shape_cast %51 : vector<1x8x16xf32> to vector<8x16xf32>
      %53 = vector.broadcast %36 : vector<8x1xf32> to vector<8x16xf32>
      %54 = arith.mulf %53, %52 : vector<8x16xf32>
      %55 = arith.addf %54, %50 : vector<8x16xf32>
      %c0_31 = arith.constant 0 : index
      %c0_32 = arith.constant 0 : index
      %c0_33 = arith.constant 0 : index
      %56 = vector.load %arg9[%c0_31, %c0_32, %c0_33] : memref<2x8x16xf32, #tpu.memory_space<vmem>>, vector<1x8x16xf32>
      %57 = vector.shape_cast %56 : vector<1x8x16xf32> to vector<8x16xf32>
      %58 = vector.shape_cast %55 : vector<8x16xf32> to vector<1x8x16xf32>
      tpu.vector_store %arg9[%c0_31, %c0_32, %c0_33], %58 {strides = array<i32>} : memref<2x8x16xf32, #tpu.memory_space<vmem>>, vector<1x8x16xf32>,
      %c0_34 = arith.constant 0 : index
      %c0_35 = arith.constant 0 : index
      %c0_36 = arith.constant 0 : index
      %59 = vector.load %arg7[%c0_34, %c0_35, %c0_36] : memref<2x8x1xf32, #tpu.memory_space<vmem>>, vector<1x8x1xf32>
      %60 = vector.shape_cast %59 : vector<1x8x1xf32> to vector<8x1xf32>
      %61 = vector.shape_cast %34 : vector<8x1xf32> to vector<1x8x1xf32>
      tpu.vector_store %arg7[%c0_34, %c0_35, %c0_36], %61 {strides = array<i32>} : memref<2x8x1xf32, #tpu.memory_space<vmem>>, vector<1x8x1xf32>,
      %c1 = arith.constant 1 : index
      %c0_37 = arith.constant 0 : index
      %c0_38 = arith.constant 0 : index
      %62 = vector.load %arg3[%c1, %c0_37, %c0_38] : memref<2x8x16xbf16, #tpu.memory_space<vmem>>, vector<1x8x16xbf16>
      %63 = vector.shape_cast %62 : vector<1x8x16xbf16> to vector<8x16xbf16>
      %cst_39 = arith.constant dense<0.000000e+00> : vector<8x8xf32>
      %64 = tpu.matmul %63, %13, %cst_39 {dimension_numbers = #tpu.dot_dimension_numbers<[1], [1], [0], [0], [0, 0, 1, 0], [], []>} : vector<8x16xbf16>, vector<8x16xbf16>, vector<8x8xf32> -> vector<8x8xf32>
      %cst_40 = arith.constant 2.500000e-01 : f32
      %65 = vector.broadcast %cst_40 : f32 to vector<8x8xf32>
      %66 = arith.mulf %64, %65 : vector<8x8xf32>
      %cst_41 = arith.constant 0xFF800000 : f32
      %67 = vector.broadcast %cst_41 : f32 to vector<8x8xf32>
      %68 = arith.select %22, %66, %67 : vector<8x8xi1>, vector<8x8xf32>
      %c1_42 = arith.constant 1 : index
      %c0_43 = arith.constant 0 : index
      %c0_44 = arith.constant 0 : index
      %69 = vector.load %arg7[%c1_42, %c0_43, %c0_44] : memref<2x8x1xf32, #tpu.memory_space<vmem>>, vector<1x8x1xf32>
      %70 = vector.shape_cast %69 : vector<1x8x1xf32> to vector<8x1xf32>
      %cst_45 = arith.constant dense<0xFF800000> : vector<8xf32>
      %71 = vector.multi_reduction <maximumf>, %68, %cst_45 [1] : vector<8x8xf32> to vector<8xf32>
      %72 = vector.shape_cast %71 : vector<8xf32> to vector<8x1xf32>
      %73 = arith.maximumf %70, %72 : vector<8x1xf32>
      %74 = arith.subf %70, %73 : vector<8x1xf32>
      %75 = math.exp %74 : vector<8x1xf32>
      %76 = vector.broadcast %73 : vector<8x1xf32> to vector<8x8xf32>
      %77 = arith.subf %68, %76 : vector<8x8xf32>
      %78 = math.exp %77 : vector<8x8xf32>
      %c1_46 = arith.constant 1 : index
      %c0_47 = arith.constant 0 : index
      %c0_48 = arith.constant 0 : index
      %79 = vector.load %arg8[%c1_46, %c0_47, %c0_48] : memref<2x8x1xf32, #tpu.memory_space<vmem>>, vector<1x8x1xf32>
      %80 = vector.shape_cast %79 : vector<1x8x1xf32> to vector<8x1xf32>
      %81 = arith.mulf %75, %80 : vector<8x1xf32>
      %cst_49 = arith.constant dense<0.000000e+00> : vector<8xf32>
      %82 = vector.multi_reduction <add>, %78, %cst_49 [1] : vector<8x8xf32> to vector<8xf32>
      %83 = vector.shape_cast %82 : vector<8xf32> to vector<8x1xf32>
      %84 = arith.addf %81, %83 : vector<8x1xf32>
      %c1_50 = arith.constant 1 : index
      %c0_51 = arith.constant 0 : index
      %c0_52 = arith.constant 0 : index
      %85 = vector.load %arg8[%c1_50, %c0_51, %c0_52] : memref<2x8x1xf32, #tpu.memory_space<vmem>>, vector<1x8x1xf32>
      %86 = vector.shape_cast %85 : vector<1x8x1xf32> to vector<8x1xf32>
      %87 = vector.shape_cast %84 : vector<8x1xf32> to vector<1x8x1xf32>
      tpu.vector_store %arg8[%c1_50, %c0_51, %c0_52], %87 {strides = array<i32>} : memref<2x8x1xf32, #tpu.memory_space<vmem>>, vector<1x8x1xf32>,
      %88 = arith.truncf %78 : vector<8x8xf32> to vector<8x8xbf16>
      %cst_53 = arith.constant dense<0.000000e+00> : vector<8x16xf32>
      %89 = tpu.matmul %88, %15, %cst_53 {dimension_numbers = #tpu.dot_dimension_numbers<[1], [0], [0], [1], [0, 0, 1, 1], [], []>} : vector<8x8xbf16>, vector<8x16xbf16>, vector<8x16xf32> -> vector<8x16xf32>
      %c1_54 = arith.constant 1 : index
      %c0_55 = arith.constant 0 : index
      %c0_56 = arith.constant 0 : index
      %90 = vector.load %arg9[%c1_54, %c0_55, %c0_56] : memref<2x8x16xf32, #tpu.memory_space<vmem>>, vector<1x8x16xf32>
      %91 = vector.shape_cast %90 : vector<1x8x16xf32> to vector<8x16xf32>
      %92 = vector.broadcast %75 : vector<8x1xf32> to vector<8x16xf32>
      %93 = arith.mulf %92, %91 : vector<8x16xf32>
      %94 = arith.addf %93, %89 : vector<8x16xf32>
      %c1_57 = arith.constant 1 : index
      %c0_58 = arith.constant 0 : index
      %c0_59 = arith.constant 0 : index
      %95 = vector.load %arg9[%c1_57, %c0_58, %c0_59] : memref<2x8x16xf32, #tpu.memory_space<vmem>>, vector<1x8x16xf32>
      %96 = vector.shape_cast %95 : vector<1x8x16xf32> to vector<8x16xf32>
      %97 = vector.shape_cast %94 : vector<8x16xf32> to vector<1x8x16xf32>
      tpu.vector_store %arg9[%c1_57, %c0_58, %c0_59], %97 {strides = array<i32>} : memref<2x8x16xf32, #tpu.memory_space<vmem>>, vector<1x8x16xf32>,
      %c1_60 = arith.constant 1 : index
      %c0_61 = arith.constant 0 : index
      %c0_62 = arith.constant 0 : index
      %98 = vector.load %arg7[%c1_60, %c0_61, %c0_62] : memref<2x8x1xf32, #tpu.memory_space<vmem>>, vector<1x8x1xf32>
      %99 = vector.shape_cast %98 : vector<1x8x1xf32> to vector<8x1xf32>
      %100 = vector.shape_cast %73 : vector<8x1xf32> to vector<1x8x1xf32>
      tpu.vector_store %arg7[%c1_60, %c0_61, %c0_62], %100 {strides = array<i32>} : memref<2x8x1xf32, #tpu.memory_space<vmem>>, vector<1x8x1xf32>,
    } else {
    }
    %c0_i32_4 = arith.constant 0 : i32
    %9 = arith.cmpi eq, %arg2, %c0_i32_4 : i32
    %10 = arith.extui %9 : i1 to i32
    %c0_i32_5 = arith.constant 0 : i32
    %11 = arith.cmpi ne, %10, %c0_i32_5 : i32
    scf.if %11 {
      %c0 = arith.constant 0 : index
      %c0_6 = arith.constant 0 : index
      %c0_7 = arith.constant 0 : index
      %12 = vector.load %arg8[%c0, %c0_6, %c0_7] : memref<2x8x1xf32, #tpu.memory_space<vmem>>, vector<1x8x1xf32>
      %13 = vector.shape_cast %12 : vector<1x8x1xf32> to vector<8x1xf32>
      %14 = tpu.reciprocal %13 {approx = true} : vector<8x1xf32> -> vector<8x1xf32>
      %c0_8 = arith.constant 0 : index
      %c0_9 = arith.constant 0 : index
      %c0_10 = arith.constant 0 : index
      %15 = vector.load %arg9[%c0_8, %c0_9, %c0_10] : memref<2x8x16xf32, #tpu.memory_space<vmem>>, vector<1x8x16xf32>
      %16 = vector.shape_cast %15 : vector<1x8x16xf32> to vector<8x16xf32>
      %17 = vector.broadcast %14 : vector<8x1xf32> to vector<8x16xf32>
      %18 = arith.mulf %16, %17 : vector<8x16xf32>
      %19 = arith.truncf %18 : vector<8x16xf32> to vector<8x16xbf16>
      %c0_11 = arith.constant 0 : index
      %c0_12 = arith.constant 0 : index
      %c0_13 = arith.constant 0 : index
      %20 = vector.load %arg6[%c0_11, %c0_12, %c0_13] : memref<2x8x16xbf16, #tpu.memory_space<vmem>>, vector<1x8x16xbf16>
      %21 = vector.shape_cast %20 : vector<1x8x16xbf16> to vector<8x16xbf16>
      %22 = vector.shape_cast %19 : vector<8x16xbf16> to vector<1x8x16xbf16>
      tpu.vector_store %arg6[%c0_11, %c0_12, %c0_13], %22 {strides = array<i32>} : memref<2x8x16xbf16, #tpu.memory_space<vmem>>, vector<1x8x16xbf16>,
      %c1 = arith.constant 1 : index
      %c0_14 = arith.constant 0 : index
      %c0_15 = arith.constant 0 : index
      %23 = vector.load %arg8[%c1, %c0_14, %c0_15] : memref<2x8x1xf32, #tpu.memory_space<vmem>>, vector<1x8x1xf32>
      %24 = vector.shape_cast %23 : vector<1x8x1xf32> to vector<8x1xf32>
      %25 = tpu.reciprocal %24 {approx = true} : vector<8x1xf32> -> vector<8x1xf32>
      %c1_16 = arith.constant 1 : index
      %c0_17 = arith.constant 0 : index
      %c0_18 = arith.constant 0 : index
      %26 = vector.load %arg9[%c1_16, %c0_17, %c0_18] : memref<2x8x16xf32, #tpu.memory_space<vmem>>, vector<1x8x16xf32>
      %27 = vector.shape_cast %26 : vector<1x8x16xf32> to vector<8x16xf32>
      %28 = vector.broadcast %25 : vector<8x1xf32> to vector<8x16xf32>
      %29 = arith.mulf %27, %28 : vector<8x16xf32>
      %30 = arith.truncf %29 : vector<8x16xf32> to vector<8x16xbf16>
      %c1_19 = arith.constant 1 : index
      %c0_20 = arith.constant 0 : index
      %c0_21 = arith.constant 0 : index
      %31 = vector.load %arg6[%c1_19, %c0_20, %c0_21] : memref<2x8x16xbf16, #tpu.memory_space<vmem>>, vector<1x8x16xbf16>
      %32 = vector.shape_cast %31 : vector<1x8x16xbf16> to vector<8x16xbf16>
      %33 = vector.shape_cast %30 : vector<8x16xbf16> to vector<1x8x16xbf16>
      tpu.vector_store %arg6[%c1_19, %c0_20, %c0_21], %33 {strides = array<i32>} : memref<2x8x16xbf16, #tpu.memory_space<vmem>>, vector<1x8x16xbf16>,
    } else {
    }
    return
  }
  func.func @transform_0(%arg0: i32, %arg1: i32, %arg2: i32) -> (i32, i32, i32) {
    %c0_i32 = arith.constant 0 : i32
    %c0_i32_0 = arith.constant 0 : i32
    return %arg0, %arg1, %c0_i32 : i32, i32, i32
  }
  func.func @transform_1(%arg0: i32, %arg1: i32, %arg2: i32) -> (i32, i32, i32) {
    %c0_i32 = arith.constant 0 : i32
    %c0_i32_0 = arith.constant 0 : i32
    return %arg0, %arg2, %c0_i32 : i32, i32, i32
  }
  func.func @transform_2(%arg0: i32, %arg1: i32, %arg2: i32) -> (i32, i32, i32) {
    %c0_i32 = arith.constant 0 : i32
    %c0_i32_0 = arith.constant 0 : i32
    return %arg0, %arg2, %c0_i32 : i32, i32, i32
  }
  func.func @transform_3(%arg0: i32, %arg1: i32, %arg2: i32) -> (i32, i32, i32) {
    %c0_i32 = arith.constant 0 : i32
    %c0_i32_0 = arith.constant 0 : i32
    return %arg0, %arg1, %c0_i32 : i32, i32, i32
  }
}

module attributes {stable_mosaic.version = 11 : i64} {
  func.func @_matmul_kernel(%arg0: i32, %arg1: i32, %arg2: i32, %arg3: memref<8x64xbf16, #tpu.memory_space<vmem>>, %arg4: memref<64x64xbf16, #tpu.memory_space<vmem>>, %arg5: memref<8x64xbf16, #tpu.memory_space<vmem>>, %arg6: memref<8x64xf32, #tpu.memory_space<vmem>>) attributes {dimension_semantics = [#tpu.dimension_semantics<parallel>, #tpu.dimension_semantics<parallel>, #tpu.dimension_semantics<arbitrary>], iteration_bounds = array<i64: 1, 1, 1>, scalar_prefetch = 0 : i64, scratch_operands = 1 : i64, tpu.core_type = #tpu.core_type<tc>, window_params = [{transform_indices = @transform_0, window_bounds = array<i64: 8, 64>}, {transform_indices = @transform_1, window_bounds = array<i64: 64, 64>}, {transform_indices = @transform_2, window_bounds = array<i64: 8, 64>}]} {
    %c0_i32 = arith.constant 0 : i32
    %0 = arith.cmpi eq, %arg2, %c0_i32 : i32
    %1 = arith.extui %0 : i1 to i32
    %c0_i32_0 = arith.constant 0 : i32
    %2 = arith.cmpi ne, %1, %c0_i32_0 : i32
    scf.if %2 {
      %cst_10 = arith.constant 0.000000e+00 : f32
      %12 = vector.broadcast %cst_10 : f32 to vector<8x64xf32>
      %c0_11 = arith.constant 0 : index
      %c0_12 = arith.constant 0 : index
      %13 = vector.load %arg6[%c0_11, %c0_12] : memref<8x64xf32, #tpu.memory_space<vmem>>, vector<8x64xf32>
      tpu.vector_store %arg6[%c0_11, %c0_12], %12 {strides = array<i32>} : memref<8x64xf32, #tpu.memory_space<vmem>>, vector<8x64xf32>,
    } else {
    }
    %c0 = arith.constant 0 : index
    %c0_1 = arith.constant 0 : index
    %3 = vector.load %arg6[%c0, %c0_1] : memref<8x64xf32, #tpu.memory_space<vmem>>, vector<8x64xf32>
    %c0_2 = arith.constant 0 : index
    %c0_3 = arith.constant 0 : index
    %4 = vector.load %arg3[%c0_2, %c0_3] : memref<8x64xbf16, #tpu.memory_space<vmem>>, vector<8x64xbf16>
    %c0_4 = arith.constant 0 : index
    %c0_5 = arith.constant 0 : index
    %5 = vector.load %arg4[%c0_4, %c0_5] : memref<64x64xbf16, #tpu.memory_space<vmem>>, vector<64x64xbf16>
    %cst = arith.constant dense<0.000000e+00> : vector<8x64xf32>
    %6 = tpu.matmul %4, %5, %cst {dimension_numbers = #tpu.dot_dimension_numbers<[1], [1], [0], [0], [0, 0, 1, 0], [], []>} : vector<8x64xbf16>, vector<64x64xbf16>, vector<8x64xf32> -> vector<8x64xf32>
    %7 = arith.addf %3, %6 : vector<8x64xf32>
    %c0_6 = arith.constant 0 : index
    %c0_7 = arith.constant 0 : index
    %8 = vector.load %arg6[%c0_6, %c0_7] : memref<8x64xf32, #tpu.memory_space<vmem>>, vector<8x64xf32>
    tpu.vector_store %arg6[%c0_6, %c0_7], %7 {strides = array<i32>} : memref<8x64xf32, #tpu.memory_space<vmem>>, vector<8x64xf32>,
    %c0_i32_8 = arith.constant 0 : i32
    %9 = arith.cmpi eq, %arg2, %c0_i32_8 : i32
    %10 = arith.extui %9 : i1 to i32
    %c0_i32_9 = arith.constant 0 : i32
    %11 = arith.cmpi ne, %10, %c0_i32_9 : i32
    scf.if %11 {
      %c0_10 = arith.constant 0 : index
      %c0_11 = arith.constant 0 : index
      %12 = vector.load %arg6[%c0_10, %c0_11] : memref<8x64xf32, #tpu.memory_space<vmem>>, vector<8x64xf32>
      %13 = arith.truncf %12 : vector<8x64xf32> to vector<8x64xbf16>
      %c0_12 = arith.constant 0 : index
      %c0_13 = arith.constant 0 : index
      %14 = vector.load %arg5[%c0_12, %c0_13] : memref<8x64xbf16, #tpu.memory_space<vmem>>, vector<8x64xbf16>
      tpu.vector_store %arg5[%c0_12, %c0_13], %13 {strides = array<i32>} : memref<8x64xbf16, #tpu.memory_space<vmem>>, vector<8x64xbf16>,
    } else {
    }
    return
  }
  func.func @transform_0(%arg0: i32, %arg1: i32, %arg2: i32) -> (i32, i32) {
    %c0_i32 = arith.constant 0 : i32
    return %arg0, %arg2 : i32, i32
  }
  func.func @transform_1(%arg0: i32, %arg1: i32, %arg2: i32) -> (i32, i32) {
    %c0_i32 = arith.constant 0 : i32
    return %arg1, %arg2 : i32, i32
  }
  func.func @transform_2(%arg0: i32, %arg1: i32, %arg2: i32) -> (i32, i32) {
    %c0_i32 = arith.constant 0 : i32
    return %arg0, %arg1 : i32, i32
  }
}

</mosaic_0001>

<llo_original>
// kernel: self_attention_forward.5
$region0: #{self_attention_forward.5}
  #allocation0 [shape = 'u32[]', space=smem, size = 0x4, offset = 0x4, fixed_abs, tag = 'smem constant byte address 0x4 - core index']
  #allocation1 [shape = 'u32[144,128]{1,0:T(1,128)}', space=vmem, size = 0x12000, scoped, tag = 'internal scratch']
  #allocation2 [shape = 'f32[8,32]{1,0:T(8,128)}', space=vmem, size = 0x1000, scoped, tag = 'scratch operand']
  %s0 = inlined_call_operand.vmem [shape: bf16[8,64], index: 0, kind: input, shape index: {}]
  %s1 = inlined_call_operand.vmem [shape: bf16[32,64], index: 1, kind: input, shape index: {}]
  %s2 = inlined_call_operand.vmem [shape: bf16[1,32], index: 2, kind: input, shape index: {}]
  %s3 = inlined_call_operand.vmem [shape: bf16[8,32], index: 3, kind: output, shape index: {}]
  %s4 = sld [smem:[#allocation0]]
  $region30: #{self_attention_forward.5} parent=0
    _
  %s6 = ssub.s32 1, %s4
  %s7 = scalar_select 0, %s6, %s4
  // Predicated region
  $region2: #{self_attention_forward.5} parent=0 // pred_check
    _
  $region3: #{self_attention_forward.5} parent=0 // pred_check_branch
    %9 = sbr.rel (0) target = $region5
  $region4: #{self_attention_forward.5} parent=0 // pred_region
    _
  $region5: #{self_attention_forward.5} parent=0 // pred_fallthru
    _
  // Predicated region
  $region6: #{self_attention_forward.5} parent=0 // pred_check
    _
  $region7: #{self_attention_forward.5} parent=0 // pred_check_branch
    %11 = sbr.rel (0) target = $region9
  $region8: #{self_attention_forward.5} parent=0 // pred_region
    _
  $region9: #{self_attention_forward.5} parent=0 // pred_fallthru
    _
  // Predicated region
  $region10: #{self_attention_forward.5} parent=0 // pred_check
    _
  $region11: #{self_attention_forward.5} parent=0 // pred_check_branch
    %13 = sbr.rel (0) target = $region13
  $region12: #{self_attention_forward.5} parent=0 // pred_region
    _
  $region13: #{self_attention_forward.5} parent=0 // pred_fallthru
    _
  %p15 = scmp.eq.s32.totalorder 0, 0
  // Predicated region
  $region14: #{self_attention_forward.5} parent=0 // pred_check
    %p16 = pneg %p15
  $region15: #{self_attention_forward.5} parent=0 // pred_check_branch
    %18 = sbr.rel (%p16) target = $region17
  $region16: #{self_attention_forward.5} parent=0 // pred_region
    %vm19 = vcmask 261120
    %20 = vst.msk [vmem:[#allocation2] sm:$0xff] %vm19, 0.0
  $region17: #{self_attention_forward.5} parent=0 // pred_fallthru
    _
  %v21 = vld [vmem:[#allocation2] sm:$0xff]
  %v22 = vld [vmem:[%s0] sm:$0xf]
  %v23 = vld [vmem:[%s1] sm:$0xf]
  %v24 = vld [vmem:[%s1 + $0x4] sm:$0xf]
  %v25 = vld [vmem:[%s1 + $0x8] sm:$0xf]
  %v26 = vld [vmem:[%s1 + $0xc] sm:$0xf]
  %v31 = vunpack.c.l.b16 %v23
  %v32 = vunpack.c.l.b16 %v24
  %v33 = vunpack.c.l.b16 %v25
  %v34 = vunpack.c.l.b16 %v26
  %v35 = vpack.c.b16 %v32, %v31
  %v36 = vpack.c.b16 %v34, %v33
  %vm37 = vcmask 523264
  %v39 = vsel %vm37, %v22, 0
  %v42 = vsel %vm37, %v35, 0
  %v45 = vsel %vm37, %v36, 0
  %47 = vmatprep.subr.bf16.mxu0 0
  %48 = vmatpush1.bf16.xpose.msra.mxu0 %v42
  %49 = vmatprep.subr.bf16.mxu0 0
  %50 = vmatpush1.bf16.xpose.msra.mxu0 %v45
  %51 = vmatprep.subr.bf16.mxu0 0
  %52 = vmatpush1.bf16.xpose.msra.mxu0 0
  %53 = vmatprep.subr.bf16.mxu0 0
  %54 = vmatpush1.bf16.xpose.msra.mxu0 0
  %55 = vmatprep.subr.bf16.mxu0 0
  %56 = vmatpush1.bf16.xpose.msra.mxu0 0
  %57 = vmatprep.subr.bf16.mxu0 0
  %58 = vmatpush1.bf16.xpose.msra.mxu0 0
  %59 = vmatprep.subr.bf16.mxu0 0
  %60 = vmatpush1.bf16.xpose.msra.mxu0 0
  %61 = vmatprep.subr.bf16.mxu0 0
  %62 = vmatpush1.bf16.xpose.msra.mxu0 0
  %63 = vmatprep.subr.bf16.mxu0 0
  %64 = vmatpush1.bf16.xpose.msra.mxu0 0
  %65 = vmatprep.subr.bf16.mxu0 0
  %66 = vmatpush1.bf16.xpose.msra.mxu0 0
  %67 = vmatprep.subr.bf16.mxu0 0
  %68 = vmatpush1.bf16.xpose.msra.mxu0 0
  %69 = vmatprep.subr.bf16.mxu0 0
  %70 = vmatpush1.bf16.xpose.msra.mxu0 0
  %71 = vmatprep.subr.bf16.mxu0 0
  %72 = vmatpush1.bf16.xpose.msra.mxu0 0
  %73 = vmatprep.subr.bf16.mxu0 0
  %74 = vmatpush1.bf16.xpose.msra.mxu0 0
  %75 = vmatprep.subr.bf16.mxu0 0
  %76 = vmatpush1.bf16.xpose.msra.mxu0 0
  %77 = vmatprep.subr.bf16.mxu0 0
  %78 = vmatpush1.bf16.xpose.msra.mxu0 0
  %79 = vmatprep.mubr.bf16.mxu0 0
  %80 = vmatmul.mubr.bf16.gmra.mrb[0].mxu0 %v39
  %v81 = vpop.f32.mrb[0].mxu0
  %v82 = vadd.f32 0.0, %v81
  %v83 = vpop.f32.mrb[0].mxu0
  %v84 = vpop.f32.mrb[0].mxu0
  %v85 = vpop.f32.mrb[0].mxu0
  %86 = vdwg.mxu0
  %v87 = vadd.f32 %v21, %v82
  %vm88 = vcmask 261120
  %89 = vst.msk [vmem:[#allocation2] sm:$0xff] %vm88, %v87
  // Predicated region
  $region18: #{self_attention_forward.5} parent=0 // pred_check
    %p90 = pneg %p15
  $region19: #{self_attention_forward.5} parent=0 // pred_check_branch
    %92 = sbr.rel (%p90) target = $region21
  $region20: #{self_attention_forward.5} parent=0 // pred_region
    %v93 = vld [vmem:[#allocation2] sm:$0xff]
    %v94 = vld [vmem:[%s2] sm:$0x1]
    %v95 = vunpack.c.l.bf16 %v94
    %v96 = vlaneseq
    %v97 = vshrl.u32 %v96, 7
    %v98 = vsub.s32 0, %v97
    %v99 = vrot.slane %v95, %v98
    %v100 = vadd.f32 %v93, %v99
    %v101 = vpack.c.bf16 %v100, %v100
    %vm102 = vcmask 257024
    %103 = vst.msk [vmem:[%s3] sm:$0xf] %vm102, %v101
  $region21: #{self_attention_forward.5} parent=0 // pred_fallthru
    _
  // Predicated region
  $region22: #{self_attention_forward.5} parent=0 // pred_check
    _
  $region23: #{self_attention_forward.5} parent=0 // pred_check_branch
    %105 = sbr.rel (0) target = $region25
  $region24: #{self_attention_forward.5} parent=0 // pred_region
    _
  $region25: #{self_attention_forward.5} parent=0 // pred_fallthru
    _
  // Predicated region
  $region26: #{self_attention_forward.5} parent=0 // pred_check
    _
  $region27: #{self_attention_forward.5} parent=0 // pred_check_branch
    %107 = sbr.rel (0) target = $region29
  $region28: #{self_attention_forward.5} parent=0 // pred_region
    _
  $region29: #{self_attention_forward.5} parent=0 // pred_fallthru
    _

// kernel: self_attention_forward.7
$region0: #{self_attention_forward.7}
  #allocation0 [shape = 'u32[]', space=smem, size = 0x4, offset = 0x4, fixed_abs, tag = 'smem constant byte address 0x4 - core index']
  #allocation1 [shape = 'u32[144,128]{1,0:T(1,128)}', space=vmem, size = 0x12000, scoped, tag = 'internal scratch']
  #allocation2 [shape = 'f32[8,64]{1,0:T(8,128)}', space=vmem, size = 0x1000, scoped, tag = 'scratch operand']
  %s0 = inlined_call_operand.vmem [shape: bf16[8,64], index: 0, kind: input, shape index: {}]
  %s1 = inlined_call_operand.vmem [shape: bf16[64,64], index: 1, kind: input, shape index: {}]
  %s2 = inlined_call_operand.hbm [shape: bf16[8,64], index: 2, kind: output, shape index: {}]
  %s3 = sld [smem:[#allocation0]]
  $region26: #{self_attention_forward.7} parent=0
    _
  %s5 = ssub.s32 1, %s3
  %s6 = scalar_select 0, %s5, %s3
  $region1: #{self_attention_forward.7} parent=0
    #allocation3 [shape = 'u8[2048]{0}', space=vmem, size = 0x800, scoped, tag = 'output window, operand 0, single buffered']
    #allocation4 [shape = 's32[1]{0}', space=sflag, size = 0x4, scoped, tag = 'scoped memory for self_attention_forward.7']
    %7 = vsyncpa [#allocation4], 0
    // Predicated region
    $region2: #{self_attention_forward.7} parent=1 // pred_check
      _
    $region3: #{self_attention_forward.7} parent=1 // pred_check_branch
      %9 = sbr.rel (0) target = $region5
    $region4: #{self_attention_forward.7} parent=1 // pred_region
      _
    $region5: #{self_attention_forward.7} parent=1 // pred_fallthru
      _
    // Predicated region
    $region6: #{self_attention_forward.7} parent=1 // pred_check
      _
    $region7: #{self_attention_forward.7} parent=1 // pred_check_branch
      %11 = sbr.rel (0) target = $region9
    $region8: #{self_attention_forward.7} parent=1 // pred_region
      _
    $region9: #{self_attention_forward.7} parent=1 // pred_fallthru
      _
    %p13 = scmp.eq.s32.totalorder 0, 0
    // Predicated region
    $region10: #{self_attention_forward.7} parent=1 // pred_check
      %p14 = pneg %p13
    $region11: #{self_attention_forward.7} parent=1 // pred_check_branch
      %16 = sbr.rel (%p14) target = $region13
    $region12: #{self_attention_forward.7} parent=1 // pred_region
      %vm17 = vcmask 523264
      %18 = vst.msk [vmem:[#allocation2] sm:$0xff] %vm17, 0.0
    $region13: #{self_attention_forward.7} parent=1 // pred_fallthru
      _
    %v19 = vld [vmem:[#allocation2] sm:$0xff]
    %v20 = vld [vmem:[%s0] sm:$0xf]
    %v21 = vld [vmem:[%s1] sm:$0xf]
    %v22 = vld [vmem:[%s1 + $0x4] sm:$0xf]
    %v23 = vld [vmem:[%s1 + $0x8] sm:$0xf]
    %v24 = vld [vmem:[%s1 + $0xc] sm:$0xf]
    %v25 = vld [vmem:[%s1 + $0x10] sm:$0xf]
    %v26 = vld [vmem:[%s1 + $0x14] sm:$0xf]
    %v27 = vld [vmem:[%s1 + $0x18] sm:$0xf]
    %v28 = vld [vmem:[%s1 + $0x1c] sm:$0xf]
    %v37 = vunpack.c.l.b16 %v21
    %v38 = vunpack.c.l.b16 %v22
    %v39 = vunpack.c.l.b16 %v23
    %v40 = vunpack.c.l.b16 %v24
    %v41 = vunpack.c.l.b16 %v25
    %v42 = vunpack.c.l.b16 %v26
    %v43 = vunpack.c.l.b16 %v27
    %v44 = vunpack.c.l.b16 %v28
    %v45 = vpack.c.b16 %v38, %v37
    %v46 = vpack.c.b16 %v40, %v39
    %v47 = vpack.c.b16 %v42, %v41
    %v48 = vpack.c.b16 %v44, %v43
    %vm49 = vcmask 523264
    %v51 = vsel %vm49, %v20, 0
    %v54 = vsel %vm49, %v45, 0
    %v57 = vsel %vm49, %v46, 0
    %v60 = vsel %vm49, %v47, 0
    %v63 = vsel %vm49, %v48, 0
    %65 = vmatprep.subr.bf16.mxu0 0
    %66 = vmatpush1.bf16.xpose.msra.mxu0 %v54
    %67 = vmatprep.subr.bf16.mxu0 0
    %68 = vmatpush1.bf16.xpose.msra.mxu0 %v57
    %69 = vmatprep.subr.bf16.mxu0 0
    %70 = vmatpush1.bf16.xpose.msra.mxu0 %v60
    %71 = vmatprep.subr.bf16.mxu0 0
    %72 = vmatpush1.bf16.xpose.msra.mxu0 %v63
    %73 = vmatprep.subr.bf16.mxu0 0
    %74 = vmatpush1.bf16.xpose.msra.mxu0 0
    %75 = vmatprep.subr.bf16.mxu0 0
    %76 = vmatpush1.bf16.xpose.msra.mxu0 0
    %77 = vmatprep.subr.bf16.mxu0 0
    %78 = vmatpush1.bf16.xpose.msra.mxu0 0
    %79 = vmatprep.subr.bf16.mxu0 0
    %80 = vmatpush1.bf16.xpose.msra.mxu0 0
    %81 = vmatprep.subr.bf16.mxu0 0
    %82 = vmatpush1.bf16.xpose.msra.mxu0 0
    %83 = vmatprep.subr.bf16.mxu0 0
    %84 = vmatpush1.bf16.xpose.msra.mxu0 0
    %85 = vmatprep.subr.bf16.mxu0 0
    %86 = vmatpush1.bf16.xpose.msra.mxu0 0
    %87 = vmatprep.subr.bf16.mxu0 0
    %88 = vmatpush1.bf16.xpose.msra.mxu0 0
    %89 = vmatprep.subr.bf16.mxu0 0
    %90 = vmatpush1.bf16.xpose.msra.mxu0 0
    %91 = vmatprep.subr.bf16.mxu0 0
    %92 = vmatpush1.bf16.xpose.msra.mxu0 0
    %93 = vmatprep.subr.bf16.mxu0 0
    %94 = vmatpush1.bf16.xpose.msra.mxu0 0
    %95 = vmatprep.subr.bf16.mxu0 0
    %96 = vmatpush1.bf16.xpose.msra.mxu0 0
    %97 = vmatprep.mubr.bf16.mxu0 0
    %98 = vmatmul.mubr.bf16.gmra.mrb[0].mxu0 %v51
    %v99 = vpop.f32.mrb[0].mxu0
    %v100 = vadd.f32 0.0, %v99
    %v101 = vpop.f32.mrb[0].mxu0
    %v102 = vpop.f32.mrb[0].mxu0
    %v103 = vpop.f32.mrb[0].mxu0
    %104 = vdwg.mxu0
    %v105 = vadd.f32 %v19, %v100
    %106 = vst.msk [vmem:[#allocation2] sm:$0xff] %vm49, %v105
    // Predicated region
    $region14: #{self_attention_forward.7} parent=1 // pred_check
      %p107 = pneg %p13
    $region15: #{self_attention_forward.7} parent=1 // pred_check_branch
      %109 = sbr.rel (%p107) target = $region17
    $region16: #{self_attention_forward.7} parent=1 // pred_region
      %v110 = vld [vmem:[#allocation2] sm:$0xff]
      %v111 = vpack.c.bf16 %v110, %v110
      %vm112 = vcmask 519168
      %113 = vst.msk [vmem:[#allocation3] sm:$0xf] %vm112, %v111
    $region17: #{self_attention_forward.7} parent=1 // pred_fallthru
      _
    // Predicated region
    $region18: #{self_attention_forward.7} parent=1 // pred_check
      _
    $region19: #{self_attention_forward.7} parent=1 // pred_check_branch
      %115 = sbr.rel (0) target = $region21
    $region20: #{self_attention_forward.7} parent=1 // pred_region
      %s117 = ssub.s32 64, 64
      %118 = vsyncadd [#allocation4], %s117
      %s120 = sshll.u32 [#allocation3], 4
      %s121 = int_to_ptr.vmem [resolvable:$true] %s120
      %123 = dma.vmem_to_hbm [thread:$0]  %s121, 64, %s2, [#allocation4]
    $region21: #{self_attention_forward.7} parent=1 // pred_fallthru
      _
    // Predicated region
    $region22: #{self_attention_forward.7} parent=1 // pred_check
      _
    $region23: #{self_attention_forward.7} parent=1 // pred_check_branch
      %125 = sbr.rel (0) target = $region25
    $region24: #{self_attention_forward.7} parent=1 // pred_region
      %126 = dma.done [#allocation4], 64
    $region25: #{self_attention_forward.7} parent=1 // pred_fallthru
      _
    %127 = vsyncpa [#allocation4], 1

// kernel: self_attention_forward.4
$region0: #{self_attention_forward.4}
  #allocation0 [shape = 'u32[]', space=smem, size = 0x4, offset = 0x4, fixed_abs, tag = 'smem constant byte address 0x4 - core index']
  #allocation1 [shape = 'u32[144,128]{1,0:T(1,128)}', space=vmem, size = 0x12000, scoped, tag = 'internal scratch']
  #allocation2 [shape = 'f32[8,96]{1,0:T(8,128)}', space=vmem, size = 0x1000, scoped, tag = 'scratch operand']
  %s0 = inlined_call_operand.vmem [shape: bf16[8,64], index: 0, kind: input, shape index: {}]
  %s1 = inlined_call_operand.vmem [shape: bf16[96,64], index: 1, kind: input, shape index: {}]
  %s2 = inlined_call_operand.vmem [shape: bf16[1,96], index: 2, kind: input, shape index: {}]
  %s3 = inlined_call_operand.vmem [shape: f32[8,4], index: 3, kind: input, shape index: {}]
  %s4 = inlined_call_operand.vmem [shape: f32[8,4], index: 4, kind: input, shape index: {}]
  %s5 = inlined_call_operand.vmem [shape: bf16[8,96], index: 5, kind: output, shape index: {}]
  %s6 = sld [smem:[#allocation0]]
  $region38: #{self_attention_forward.4} parent=0
    _
  %s8 = ssub.s32 1, %s6
  %s9 = scalar_select 0, %s8, %s6
  // Predicated region
  $region2: #{self_attention_forward.4} parent=0 // pred_check
    _
  $region3: #{self_attention_forward.4} parent=0 // pred_check_branch
    %11 = sbr.rel (0) target = $region5
  $region4: #{self_attention_forward.4} parent=0 // pred_region
    _
  $region5: #{self_attention_forward.4} parent=0 // pred_fallthru
    _
  // Predicated region
  $region6: #{self_attention_forward.4} parent=0 // pred_check
    _
  $region7: #{self_attention_forward.4} parent=0 // pred_check_branch
    %13 = sbr.rel (0) target = $region9
  $region8: #{self_attention_forward.4} parent=0 // pred_region
    _
  $region9: #{self_attention_forward.4} parent=0 // pred_fallthru
    _
  // Predicated region
  $region10: #{self_attention_forward.4} parent=0 // pred_check
    _
  $region11: #{self_attention_forward.4} parent=0 // pred_check_branch
    %15 = sbr.rel (0) target = $region13
  $region12: #{self_attention_forward.4} parent=0 // pred_region
    _
  $region13: #{self_attention_forward.4} parent=0 // pred_fallthru
    _
  // Predicated region
  $region14: #{self_attention_forward.4} parent=0 // pred_check
    _
  $region15: #{self_attention_forward.4} parent=0 // pred_check_branch
    %17 = sbr.rel (0) target = $region17
  $region16: #{self_attention_forward.4} parent=0 // pred_region
    _
  $region17: #{self_attention_forward.4} parent=0 // pred_fallthru
    _
  // Predicated region
  $region18: #{self_attention_forward.4} parent=0 // pred_check
    _
  $region19: #{self_attention_forward.4} parent=0 // pred_check_branch
    %19 = sbr.rel (0) target = $region21
  $region20: #{self_attention_forward.4} parent=0 // pred_region
    _
  $region21: #{self_attention_forward.4} parent=0 // pred_fallthru
    _
  %p21 = scmp.eq.s32.totalorder 0, 0
  // Predicated region
  $region22: #{self_attention_forward.4} parent=0 // pred_check
    %p22 = pneg %p21
  $region23: #{self_attention_forward.4} parent=0 // pred_check_branch
    %24 = sbr.rel (%p22) target = $region25
  $region24: #{self_attention_forward.4} parent=0 // pred_region
    %vm25 = vcmask 785408
    %26 = vst.msk [vmem:[#allocation2] sm:$0xff] %vm25, 0.0
  $region25: #{self_attention_forward.4} parent=0 // pred_fallthru
    _
  %v27 = vld [vmem:[#allocation2] sm:$0xff]
  %v28 = vld [vmem:[%s0] sm:$0xf]
  %v29 = vld [vmem:[%s1] sm:$0xf]
  %v30 = vld [vmem:[%s1 + $0x4] sm:$0xf]
  %v31 = vld [vmem:[%s1 + $0x8] sm:$0xf]
  %v32 = vld [vmem:[%s1 + $0xc] sm:$0xf]
  %v33 = vld [vmem:[%s1 + $0x10] sm:$0xf]
  %v34 = vld [vmem:[%s1 + $0x14] sm:$0xf]
  %v35 = vld [vmem:[%s1 + $0x18] sm:$0xf]
  %v36 = vld [vmem:[%s1 + $0x1c] sm:$0xf]
  %v37 = vld [vmem:[%s1 + $0x20] sm:$0xf]
  %v38 = vld [vmem:[%s1 + $0x24] sm:$0xf]
  %v39 = vld [vmem:[%s1 + $0x28] sm:$0xf]
  %v40 = vld [vmem:[%s1 + $0x2c] sm:$0xf]
  %v53 = vunpack.c.l.b16 %v29
  %v54 = vunpack.c.l.b16 %v30
  %v55 = vunpack.c.l.b16 %v31
  %v56 = vunpack.c.l.b16 %v32
  %v57 = vunpack.c.l.b16 %v33
  %v58 = vunpack.c.l.b16 %v34
  %v59 = vunpack.c.l.b16 %v35
  %v60 = vunpack.c.l.b16 %v36
  %v61 = vunpack.c.l.b16 %v37
  %v62 = vunpack.c.l.b16 %v38
  %v63 = vunpack.c.l.b16 %v39
  %v64 = vunpack.c.l.b16 %v40
  %v65 = vpack.c.b16 %v54, %v53
  %v66 = vpack.c.b16 %v56, %v55
  %v67 = vpack.c.b16 %v58, %v57
  %v68 = vpack.c.b16 %v60, %v59
  %v69 = vpack.c.b16 %v62, %v61
  %v70 = vpack.c.b16 %v64, %v63
  %vm71 = vcmask 523264
  %v73 = vsel %vm71, %v28, 0
  %v76 = vsel %vm71, %v65, 0
  %v79 = vsel %vm71, %v66, 0
  %v82 = vsel %vm71, %v67, 0
  %v85 = vsel %vm71, %v68, 0
  %v88 = vsel %vm71, %v69, 0
  %v91 = vsel %vm71, %v70, 0
  %93 = vmatprep.subr.bf16.mxu0 0
  %94 = vmatpush1.bf16.xpose.msra.mxu0 %v76
  %95 = vmatprep.subr.bf16.mxu0 0
  %96 = vmatpush1.bf16.xpose.msra.mxu0 %v79
  %97 = vmatprep.subr.bf16.mxu0 0
  %98 = vmatpush1.bf16.xpose.msra.mxu0 %v82
  %99 = vmatprep.subr.bf16.mxu0 0
  %100 = vmatpush1.bf16.xpose.msra.mxu0 %v85
  %101 = vmatprep.subr.bf16.mxu0 0
  %102 = vmatpush1.bf16.xpose.msra.mxu0 %v88
  %103 = vmatprep.subr.bf16.mxu0 0
  %104 = vmatpush1.bf16.xpose.msra.mxu0 %v91
  %105 = vmatprep.subr.bf16.mxu0 0
  %106 = vmatpush1.bf16.xpose.msra.mxu0 0
  %107 = vmatprep.subr.bf16.mxu0 0
  %108 = vmatpush1.bf16.xpose.msra.mxu0 0
  %109 = vmatprep.subr.bf16.mxu0 0
  %110 = vmatpush1.bf16.xpose.msra.mxu0 0
  %111 = vmatprep.subr.bf16.mxu0 0
  %112 = vmatpush1.bf16.xpose.msra.mxu0 0
  %113 = vmatprep.subr.bf16.mxu0 0
  %114 = vmatpush1.bf16.xpose.msra.mxu0 0
  %115 = vmatprep.subr.bf16.mxu0 0
  %116 = vmatpush1.bf16.xpose.msra.mxu0 0
  %117 = vmatprep.subr.bf16.mxu0 0
  %118 = vmatpush1.bf16.xpose.msra.mxu0 0
  %119 = vmatprep.subr.bf16.mxu0 0
  %120 = vmatpush1.bf16.xpose.msra.mxu0 0
  %121 = vmatprep.subr.bf16.mxu0 0
  %122 = vmatpush1.bf16.xpose.msra.mxu0 0
  %123 = vmatprep.subr.bf16.mxu0 0
  %124 = vmatpush1.bf16.xpose.msra.mxu0 0
  %125 = vmatprep.mubr.bf16.mxu0 0
  %126 = vmatmul.mubr.bf16.gmra.mrb[0].mxu0 %v73
  %v127 = vpop.f32.mrb[0].mxu0
  %v128 = vadd.f32 0.0, %v127
  %v129 = vpop.f32.mrb[0].mxu0
  %v130 = vpop.f32.mrb[0].mxu0
  %v131 = vpop.f32.mrb[0].mxu0
  %132 = vdwg.mxu0
  %v133 = vadd.f32 %v27, %v128
  %vm134 = vcmask 785408
  %135 = vst.msk [vmem:[#allocation2] sm:$0xff] %vm134, %v133
  // Predicated region
  $region26: #{self_attention_forward.4} parent=0 // pred_check
    %p136 = pneg %p21
  $region27: #{self_attention_forward.4} parent=0 // pred_check_branch
    %138 = sbr.rel (%p136) target = $region29
  $region28: #{self_attention_forward.4} parent=0 // pred_region
    %v139 = vld [vmem:[#allocation2] sm:$0xff]
    %v140 = vld [vmem:[%s2] sm:$0x1]
    %v141 = vunpack.c.l.bf16 %v140
    %v142 = vlaneseq
    %v143 = vshrl.u32 %v142, 7
    %v144 = vsub.s32 0, %v143
    %v145 = vrot.slane %v141, %v144
    %v146 = vadd.f32 %v139, %v145
    %v147 = vld [vmem:[%s3] sm:$0xff]
    %v148 = vld [vmem:[%s4] sm:$0xff]
    %v149 = vmul.f32 %v146, %v147
    %151 = vrot.lane.b32.xlu0 %v148, 4
    %v152 = vpop.permute.xlu0 %151
    %v154 = vmul.f32 %v146, %v152
    %156 = vrot.lane.b32.xlu0 %v154, 124
    %v157 = vpop.permute.xlu0 %156
    %v159 = vsub.f32 %v149, %v157
    %v160 = vpack.c.bf16 %v159, %v159
    %vm161 = vcmask 27648
    %162 = vst.msk [vmem:[%s5] sm:$0xf] %vm161, %v160
    %164 = vrot.lane.b32.xlu0 %v147, 4
    %v165 = vpop.permute.xlu0 %164
    %v167 = vmul.f32 %v146, %v165
    %v168 = vmul.f32 %v146, %v148
    %170 = vrot.lane.b32.xlu0 %v168, 4
    %v171 = vpop.permute.xlu0 %170
    %v173 = vadd.f32 %v167, %v171
    %v174 = vpack.c.bf16 %v173, %v173
    %vm175 = vcmask 60448
    %176 = vst.msk [vmem:[%s5] sm:$0xf] %vm175, %v174
    %v177 = vpack.c.bf16 %v146, %v146
    %vm178 = vcmask 126016
    %179 = vst.msk [vmem:[%s5] sm:$0xf] %vm178, %v177
    %180 = vrot.lane.b32.xlu0 %v147, 16
    %v181 = vpop.permute.xlu0 %180
    %v183 = vmul.f32 %v146, %v181
    %184 = vrot.lane.b32.xlu0 %v148, 20
    %v185 = vpop.permute.xlu0 %184
    %v187 = vmul.f32 %v146, %v185
    %189 = vrot.lane.b32.xlu0 %v187, 124
    %v190 = vpop.permute.xlu0 %189
    %v192 = vsub.f32 %v183, %v190
    %v193 = vpack.c.bf16 %v192, %v192
    %vm194 = vcmask 158848
    %195 = vst.msk [vmem:[%s5] sm:$0xf] %vm194, %v193
    %196 = vrot.lane.b32.xlu0 %v147, 20
    %v197 = vpop.permute.xlu0 %196
    %v199 = vmul.f32 %v146, %v197
    %200 = vrot.lane.b32.xlu0 %v148, 16
    %v201 = vpop.permute.xlu0 %200
    %v203 = vmul.f32 %v146, %v201
    %205 = vrot.lane.b32.xlu0 %v203, 4
    %v206 = vpop.permute.xlu0 %205
    %v208 = vadd.f32 %v199, %v206
    %v209 = vpack.c.bf16 %v208, %v208
    %vm210 = vcmask 191648
    %211 = vst.msk [vmem:[%s5] sm:$0xf] %vm210, %v209
    %vm212 = vcmask 257216
    %213 = vst.msk [vmem:[%s5] sm:$0xf] %vm212, %v177
    %214 = vrot.lane.b32.xlu0 %v147, 32
    %v215 = vpop.permute.xlu0 %214
    %v217 = vmul.f32 %v146, %v215
    %218 = vrot.lane.b32.xlu0 %v148, 36
    %v219 = vpop.permute.xlu0 %218
    %v221 = vmul.f32 %v146, %v219
    %223 = vrot.lane.b32.xlu0 %v221, 124
    %v224 = vpop.permute.xlu0 %223
    %v226 = vsub.f32 %v217, %v224
    %v227 = vpack.c.bf16 %v226, %v226
    %vm228 = vcmask 290048
    %229 = vst.msk [vmem:[%s5] sm:$0xf] %vm228, %v227
    %230 = vrot.lane.b32.xlu0 %v147, 36
    %v231 = vpop.permute.xlu0 %230
    %v233 = vmul.f32 %v146, %v231
    %234 = vrot.lane.b32.xlu0 %v148, 32
    %v235 = vpop.permute.xlu0 %234
    %v237 = vmul.f32 %v146, %v235
    %239 = vrot.lane.b32.xlu0 %v237, 4
    %v240 = vpop.permute.xlu0 %239
    %v242 = vadd.f32 %v233, %v240
    %v243 = vpack.c.bf16 %v242, %v242
    %vm244 = vcmask 322848
    %245 = vst.msk [vmem:[%s5] sm:$0xf] %vm244, %v243
    %vm246 = vcmask 388416
    %247 = vst.msk [vmem:[%s5] sm:$0xf] %vm246, %v177
    %248 = vrot.lane.b32.xlu0 %v147, 48
    %v249 = vpop.permute.xlu0 %248
    %v251 = vmul.f32 %v146, %v249
    %252 = vrot.lane.b32.xlu0 %v148, 52
    %v253 = vpop.permute.xlu0 %252
    %v255 = vmul.f32 %v146, %v253
    %257 = vrot.lane.b32.xlu0 %v255, 124
    %v258 = vpop.permute.xlu0 %257
    %v260 = vsub.f32 %v251, %v258
    %v261 = vpack.c.bf16 %v260, %v260
    %vm262 = vcmask 421248
    %263 = vst.msk [vmem:[%s5] sm:$0xf] %vm262, %v261
    %264 = vrot.lane.b32.xlu0 %v147, 52
    %v265 = vpop.permute.xlu0 %264
    %v267 = vmul.f32 %v146, %v265
    %268 = vrot.lane.b32.xlu0 %v148, 48
    %v269 = vpop.permute.xlu0 %268
    %v271 = vmul.f32 %v146, %v269
    %273 = vrot.lane.b32.xlu0 %v271, 4
    %v274 = vpop.permute.xlu0 %273
    %v276 = vadd.f32 %v267, %v274
    %v277 = vpack.c.bf16 %v276, %v276
    %vm278 = vcmask 454048
    %279 = vst.msk [vmem:[%s5] sm:$0xf] %vm278, %v277
    %vm280 = vcmask 519616
    %281 = vst.msk [vmem:[%s5] sm:$0xf] %vm280, %v177
    %282 = vrot.lane.b32.xlu0 %v147, 64
    %v283 = vpop.permute.xlu0 %282
    %v285 = vmul.f32 %v146, %v283
    %286 = vrot.lane.b32.xlu0 %v148, 68
    %v287 = vpop.permute.xlu0 %286
    %v289 = vmul.f32 %v146, %v287
    %291 = vrot.lane.b32.xlu0 %v289, 124
    %v292 = vpop.permute.xlu0 %291
    %v294 = vsub.f32 %v285, %v292
    %v295 = vpack.c.bf16 %v294, %v294
    %vm296 = vcmask 552448
    %297 = vst.msk [vmem:[%s5] sm:$0xf] %vm296, %v295
    %298 = vrot.lane.b32.xlu0 %v147, 68
    %v299 = vpop.permute.xlu0 %298
    %v301 = vmul.f32 %v146, %v299
    %302 = vrot.lane.b32.xlu0 %v148, 64
    %v303 = vpop.permute.xlu0 %302
    %v305 = vmul.f32 %v146, %v303
    %307 = vrot.lane.b32.xlu0 %v305, 4
    %v308 = vpop.permute.xlu0 %307
    %v310 = vadd.f32 %v301, %v308
    %v311 = vpack.c.bf16 %v310, %v310
    %vm312 = vcmask 585248
    %313 = vst.msk [vmem:[%s5] sm:$0xf] %vm312, %v311
    %vm314 = vcmask 650816
    %315 = vst.msk [vmem:[%s5] sm:$0xf] %vm314, %v177
    %316 = vrot.lane.b32.xlu0 %v147, 80
    %v317 = vpop.permute.xlu0 %316
    %v319 = vmul.f32 %v146, %v317
    %320 = vrot.lane.b32.xlu0 %v148, 84
    %v321 = vpop.permute.xlu0 %320
    %v323 = vmul.f32 %v146, %v321
    %325 = vrot.lane.b32.xlu0 %v323, 124
    %v326 = vpop.permute.xlu0 %325
    %v328 = vsub.f32 %v319, %v326
    %v329 = vpack.c.bf16 %v328, %v328
    %vm330 = vcmask 683648
    %331 = vst.msk [vmem:[%s5] sm:$0xf] %vm330, %v329
    %332 = vrot.lane.b32.xlu0 %v147, 84
    %v333 = vpop.permute.xlu0 %332
    %v335 = vmul.f32 %v146, %v333
    %336 = vrot.lane.b32.xlu0 %v148, 80
    %v337 = vpop.permute.xlu0 %336
    %v339 = vmul.f32 %v146, %v337
    %341 = vrot.lane.b32.xlu0 %v339, 4
    %v342 = vpop.permute.xlu0 %341
    %v344 = vadd.f32 %v335, %v342
    %v345 = vpack.c.bf16 %v344, %v344
    %vm346 = vcmask 716448
    %347 = vst.msk [vmem:[%s5] sm:$0xf] %vm346, %v345
    %vm348 = vcmask 782016
    %349 = vst.msk [vmem:[%s5] sm:$0xf] %vm348, %v177
  $region29: #{self_attention_forward.4} parent=0 // pred_fallthru
    _
  // Predicated region
  $region30: #{self_attention_forward.4} parent=0 // pred_check
    _
  $region31: #{self_attention_forward.4} parent=0 // pred_check_branch
    %351 = sbr.rel (0) target = $region33
  $region32: #{self_attention_forward.4} parent=0 // pred_region
    _
  $region33: #{self_attention_forward.4} parent=0 // pred_fallthru
    _
  // Predicated region
  $region34: #{self_attention_forward.4} parent=0 // pred_check
    _
  $region35: #{self_attention_forward.4} parent=0 // pred_check_branch
    %353 = sbr.rel (0) target = $region37
  $region36: #{self_attention_forward.4} parent=0 // pred_region
    _
  $region37: #{self_attention_forward.4} parent=0 // pred_fallthru
    _

// kernel: self_attention_forward.6
$region0: #{self_attention_forward.6}
  #allocation0 [shape = 'u32[]', space=smem, size = 0x4, offset = 0x4, fixed_abs, tag = 'smem constant byte address 0x4 - core index']
  #allocation1 [shape = 'u32[144,128]{1,0:T(1,128)}', space=vmem, size = 0x12000, scoped, tag = 'internal scratch']
  #allocation2 [shape = 'f32[2,8,1]{2,1,0:T(8,128)}', space=vmem, size = 0x2000, scoped, tag = 'scratch operand']
  #allocation3 [shape = 'f32[2,8,1]{2,1,0:T(8,128)}', space=vmem, size = 0x2000, scoped, tag = 'scratch operand']
  #allocation4 [shape = 'f32[2,8,16]{2,1,0:T(8,128)}', space=vmem, size = 0x2000, scoped, tag = 'scratch operand']
  %s0 = inlined_call_operand.vmem [shape: bf16[4,8,16], index: 0, kind: input, shape index: {}]
  %s1 = inlined_call_operand.vmem [shape: bf16[2,8,16], index: 1, kind: input, shape index: {}]
  %s2 = inlined_call_operand.vmem [shape: bf16[2,8,16], index: 2, kind: input, shape index: {}]
  %s3 = inlined_call_operand.vmem [shape: bf16[4,8,16], index: 3, kind: output, shape index: {}]
  %s4 = sld [smem:[#allocation0]]
  $region57: #{self_attention_forward.6} parent=0
    _
  %s6 = ssub.s32 1, %s4
  %s7 = scalar_select 0, %s6, %s4
  loop: start=0, step=1, limit=4
  $region2: #{self_attention_forward.6} parent=0 // loop_pre_header
    _
  $region3: #{self_attention_forward.6} parent=0 // loop_header
    %s9 = sphi 0, %s13
    %p10 = scmp.ge.s32.totalorder %s9, 4
    %s16 = sphi 0, %s35
    %s17 = sphi 0, %s31
    %s18 = sphi 0, %s27
    %s19 = sphi 0, %s16
    %s20 = sphi 0, %s17
    %s21 = sphi 0, %s18
    %s22 = sphi 0, %s19
    %s23 = sphi 0, %s20
    %s24 = sphi 0, %s21
    %s40 = sphi 0, %s42
    %s43 = sphi 0, %s40
    %s44 = sphi 0, %s43
    %s60 = sphi 0, %s44
    %s68 = sphi 0, %s70
    %s71 = sphi 0, %s68
    %s72 = sphi 0, %s71
    %s88 = sphi 0, %s72
    %s96 = sphi 0, %s98
    %s99 = sphi 0, %s96
    %s100 = sphi 0, %s99
    %s116 = sphi 0, %s100
    %s124 = sphi 0, %s126
    %s127 = sphi 0, %s124
    %s128 = sphi 0, %s127
    %s144 = sphi 0, %s128
  $region4: #{self_attention_forward.6} parent=0 // loop_header_branch
    %12 = sbr.rel (%p10) target = $region8
  $region5: #{self_attention_forward.6} parent=0 // loop_body
    %s14 = ssub.s32 %s9, 1
    %s15 = ssub.s32 %s9, 2
    %s25 = sadd.s32 1, %s18
    %p26 = scmp.ge.s32.totalorder %s25, 1
    %s27 = scalar_select %p26, 0, %s25
    %s28 = sadd.s32 1, %s17
    %s29 = scalar_select %p26, %s28, %s17
    %p30 = scmp.ge.s32.totalorder %s29, 1
    %s31 = scalar_select %p30, 0, %s29
    %s32 = sadd.s32 1, %s16
    %s33 = scalar_select %p30, %s32, %s16
    %p34 = scmp.ge.s32.totalorder %s33, 2
    %s35 = scalar_select %p34, 0, %s33
    %s36 = ssub.s32 %s16, %s35
    %s37 = ssub.s32 %s17, %s31
    %s38 = sor.u32 %s36, %s37
    %p39 = scmp.eq.s32.totalorder %s38, 0
    %s41 = sadd.s32 %s40, 1
    %s42 = scalar_select %p39, %s40, %s41
    %p45 = pneg %p39
    %p46 = scmp.eq.s32.totalorder %s9, 1
    %p47 = por %p45, %p46
    %p48 = scmp.ne.s32.totalorder %s40, %s43
    %p49 = scmp.eq.s32.totalorder %s9, 0
    %p50 = por %p48, %p49
    %p51 = scmp.ne.s32.totalorder %s40, %s43
    %p52 = scmp.eq.s32.totalorder %s14, 1
    %p53 = por %p51, %p52
    %p54 = scmp.ne.s32.totalorder %s43, %s44
    %p55 = scmp.eq.s32.totalorder %s14, 0
    %p56 = por %p54, %p55
    %p57 = scmp.ne.s32.totalorder %s43, %s44
    %p58 = scmp.eq.s32.totalorder %s15, 1
    %p59 = por %p57, %p58
    %p61 = scmp.ne.s32.totalorder %s44, %s60
    %p62 = scmp.eq.s32.totalorder %s15, 0
    %p63 = por %p61, %p62
    %s64 = ssub.s32 %s16, %s35
    %s65 = ssub.s32 %s18, %s27
    %s66 = sor.u32 %s64, %s65
    %p67 = scmp.eq.s32.totalorder %s66, 0
    %s69 = sadd.s32 %s68, 1
    %s70 = scalar_select %p67, %s68, %s69
    %p73 = pneg %p67
    %p74 = scmp.eq.s32.totalorder %s9, 1
    %p75 = por %p73, %p74
    %p76 = scmp.ne.s32.totalorder %s68, %s71
    %p77 = scmp.eq.s32.totalorder %s9, 0
    %p78 = por %p76, %p77
    %p79 = scmp.ne.s32.totalorder %s68, %s71
    %p80 = scmp.eq.s32.totalorder %s14, 1
    %p81 = por %p79, %p80
    %p82 = scmp.ne.s32.totalorder %s71, %s72
    %p83 = scmp.eq.s32.totalorder %s14, 0
    %p84 = por %p82, %p83
    %p85 = scmp.ne.s32.totalorder %s71, %s72
    %p86 = scmp.eq.s32.totalorder %s15, 1
    %p87 = por %p85, %p86
    %p89 = scmp.ne.s32.totalorder %s72, %s88
    %p90 = scmp.eq.s32.totalorder %s15, 0
    %p91 = por %p89, %p90
    %s92 = ssub.s32 %s16, %s35
    %s93 = ssub.s32 %s18, %s27
    %s94 = sor.u32 %s92, %s93
    %p95 = scmp.eq.s32.totalorder %s94, 0
    %s97 = sadd.s32 %s96, 1
    %s98 = scalar_select %p95, %s96, %s97
    %p101 = pneg %p95
    %p102 = scmp.eq.s32.totalorder %s9, 1
    %p103 = por %p101, %p102
    %p104 = scmp.ne.s32.totalorder %s96, %s99
    %p105 = scmp.eq.s32.totalorder %s9, 0
    %p106 = por %p104, %p105
    %p107 = scmp.ne.s32.totalorder %s96, %s99
    %p108 = scmp.eq.s32.totalorder %s14, 1
    %p109 = por %p107, %p108
    %p110 = scmp.ne.s32.totalorder %s99, %s100
    %p111 = scmp.eq.s32.totalorder %s14, 0
    %p112 = por %p110, %p111
    %p113 = scmp.ne.s32.totalorder %s99, %s100
    %p114 = scmp.eq.s32.totalorder %s15, 1
    %p115 = por %p113, %p114
    %p117 = scmp.ne.s32.totalorder %s100, %s116
    %p118 = scmp.eq.s32.totalorder %s15, 0
    %p119 = por %p117, %p118
    %s120 = ssub.s32 %s16, %s35
    %s121 = ssub.s32 %s17, %s31
    %s122 = sor.u32 %s120, %s121
    %p123 = scmp.eq.s32.totalorder %s122, 0
    %s125 = sadd.s32 %s124, 1
    %s126 = scalar_select %p123, %s124, %s125
    %p129 = pneg %p123
    %p130 = scmp.eq.s32.totalorder %s9, 1
    %p131 = por %p129, %p130
    %p132 = scmp.ne.s32.totalorder %s124, %s127
    %p133 = scmp.eq.s32.totalorder %s9, 0
    %p134 = por %p132, %p133
    %p135 = scmp.ne.s32.totalorder %s124, %s127
    %p136 = scmp.eq.s32.totalorder %s14, 1
    %p137 = por %p135, %p136
    %p138 = scmp.ne.s32.totalorder %s127, %s128
    %p139 = scmp.eq.s32.totalorder %s14, 0
    %p140 = por %p138, %p139
    %p141 = scmp.ne.s32.totalorder %s127, %s128
    %p142 = scmp.eq.s32.totalorder %s15, 1
    %p143 = por %p141, %p142
    %p145 = scmp.ne.s32.totalorder %s128, %s144
    %p146 = scmp.eq.s32.totalorder %s15, 0
    %p147 = por %p145, %p146
    %p148 = scmp.le.s32.totalorder 1, %s9
    %p149 = scmp.lt.s32.totalorder %s9, 3
    %p150 = pnand %p148, %p149
    %p151 = pneg %p150
    // Predicated region
    $region9: #{self_attention_forward.6} parent=5 // pred_check
      _
    $region10: #{self_attention_forward.6} parent=5 // pred_check_branch
      %153 = sbr.rel (%p150) target = $region12
    $region11: #{self_attention_forward.6} parent=5 // pred_region
      %s154 = ssub.s32 %s9, 1
    $region12: #{self_attention_forward.6} parent=5 // pred_fallthru
      _
    %p155 = scmp.lt.s32.totalorder %s9, 2
    // Predicated region
    $region13: #{self_attention_forward.6} parent=5 // pred_check
      %p156 = pneg %p155
    $region14: #{self_attention_forward.6} parent=5 // pred_check_branch
      %158 = sbr.rel (%p156) target = $region16
    $region15: #{self_attention_forward.6} parent=5 // pred_region
      // Predicated region
      $region17: #{self_attention_forward.6} parent=15 // pred_check
        %p159 = pneg %p50
      $region18: #{self_attention_forward.6} parent=15 // pred_check_branch
        %161 = sbr.rel (%p159) target = $region20
      $region19: #{self_attention_forward.6} parent=15 // pred_region
        %s162 = smul.u32 2, %s16
        %p163 = scmp.lt.s32.totalorder %s162, 3
        %s164 = scalar_select %p163, %s162, 3
        %p165 = scmp.lt.s32.totalorder %s17, 0
        %s166 = scalar_select %p165, %s17, 0
        %s167 = sadd.s32 %s166, %s164
        %s168 = smul.addr %s167, 4
        %s169 = scalar_lea.vmem %s0, %s168
        %s170 = smul.u32 2, %s16
      $region20: #{self_attention_forward.6} parent=15 // pred_fallthru
        _
      // Predicated region
      $region21: #{self_attention_forward.6} parent=15 // pred_check
        %p171 = pneg %p78
      $region22: #{self_attention_forward.6} parent=15 // pred_check_branch
        %173 = sbr.rel (%p171) target = $region24
      $region23: #{self_attention_forward.6} parent=15 // pred_region
        %p174 = scmp.lt.s32.totalorder %s16, 1
        %s175 = scalar_select %p174, %s16, 1
        %p176 = scmp.lt.s32.totalorder %s18, 0
        %s177 = scalar_select %p176, %s18, 0
        %s178 = sadd.s32 %s177, %s175
        %s179 = smul.addr %s178, 4
        %s180 = scalar_lea.vmem %s1, %s179
      $region24: #{self_attention_forward.6} parent=15 // pred_fallthru
        _
      // Predicated region
      $region25: #{self_attention_forward.6} parent=15 // pred_check
        %p181 = pneg %p106
      $region26: #{self_attention_forward.6} parent=15 // pred_check_branch
        %183 = sbr.rel (%p181) target = $region28
      $region27: #{self_attention_forward.6} parent=15 // pred_region
        %p184 = scmp.lt.s32.totalorder %s16, 1
        %s185 = scalar_select %p184, %s16, 1
        %p186 = scmp.lt.s32.totalorder %s18, 0
        %s187 = scalar_select %p186, %s18, 0
        %s188 = sadd.s32 %s187, %s185
        %s189 = smul.addr %s188, 4
        %s190 = scalar_lea.vmem %s2, %s189
      $region28: #{self_attention_forward.6} parent=15 // pred_fallthru
        _
    $region16: #{self_attention_forward.6} parent=5 // pred_fallthru
      _
    %p191 = scmp.le.s32.totalorder 1, %s9
    %p192 = scmp.lt.s32.totalorder %s9, 3
    %p193 = pnand %p191, %p192
    %p194 = pneg %p193
    // Predicated region
    $region29: #{self_attention_forward.6} parent=5 // pred_check
      _
    $region30: #{self_attention_forward.6} parent=5 // pred_check_branch
      %196 = sbr.rel (%p193) target = $region32
    $region31: #{self_attention_forward.6} parent=5 // pred_region
      %s197 = ssub.s32 %s9, 1
      %s198 = smul.u32 2, %s19
      %p199 = scmp.lt.s32.totalorder %s198, 3
      %s200 = scalar_select %p199, %s198, 3
      %p201 = scmp.lt.s32.totalorder %s20, 0
      %s202 = scalar_select %p201, %s20, 0
      %s203 = sadd.s32 %s202, %s200
      %s204 = smul.addr %s203, 4
      %s205 = scalar_lea.vmem %s0, %s204
      %p206 = pneg %p56
      %p207 = pneg %p53
      %p208 = scmp.lt.s32.totalorder %s19, 1
      %s209 = scalar_select %p208, %s19, 1
      %p210 = scmp.lt.s32.totalorder %s21, 0
      %s211 = scalar_select %p210, %s21, 0
      %s212 = sadd.s32 %s211, %s209
      %s213 = smul.addr %s212, 4
      %s214 = scalar_lea.vmem %s1, %s213
      %p215 = pneg %p84
      %p216 = pneg %p81
      %p217 = scmp.lt.s32.totalorder %s19, 1
      %s218 = scalar_select %p217, %s19, 1
      %p219 = scmp.lt.s32.totalorder %s21, 0
      %s220 = scalar_select %p219, %s21, 0
      %s221 = sadd.s32 %s220, %s218
      %s222 = smul.addr %s221, 4
      %s223 = scalar_lea.vmem %s2, %s222
      %p224 = pneg %p112
      %p225 = pneg %p109
      %p226 = pneg %p140
      %p227 = pneg %p137
      %s228 = smul.u32 2, %s19
      %p229 = scmp.lt.s32.totalorder %s228, 3
      %s230 = scalar_select %p229, %s228, 3
      %p231 = scmp.lt.s32.totalorder %s20, 0
      %s232 = scalar_select %p231, %s20, 0
      %s233 = sadd.s32 %s232, %s230
      %s234 = smul.addr %s233, 4
      %s235 = scalar_lea.vmem %s3, %s234
      %s236 = smul.u32 2, %s19
      %p237 = scmp.lt.s32.totalorder %s236, 3
      %s238 = scalar_select %p237, %s236, 3
      %p239 = scmp.lt.s32.totalorder %s20, 0
      %s240 = scalar_select %p239, %s20, 0
      %s241 = sadd.s32 %s240, %s238
      %s242 = smul.addr %s241, 4
      %s243 = scalar_lea.vmem %s0, %s242
      %s244 = smul.u32 2, %s19
      %p245 = scmp.lt.s32.totalorder %s19, 1
      %s246 = scalar_select %p245, %s19, 1
      %p247 = scmp.lt.s32.totalorder %s21, 0
      %s248 = scalar_select %p247, %s21, 0
      %s249 = sadd.s32 %s248, %s246
      %s250 = smul.addr %s249, 4
      %s251 = scalar_lea.vmem %s1, %s250
      %p252 = scmp.lt.s32.totalorder %s19, 1
      %s253 = scalar_select %p252, %s19, 1
      %p254 = scmp.lt.s32.totalorder %s21, 0
      %s255 = scalar_select %p254, %s21, 0
      %s256 = sadd.s32 %s255, %s253
      %s257 = smul.addr %s256, 4
      %s258 = scalar_lea.vmem %s2, %s257
      %s259 = smul.u32 2, %s19
      %p260 = scmp.lt.s32.totalorder %s259, 3
      %s261 = scalar_select %p260, %s259, 3
      %p262 = scmp.lt.s32.totalorder %s20, 0
      %s263 = scalar_select %p262, %s20, 0
      %s264 = sadd.s32 %s263, %s261
      %s265 = smul.addr %s264, 4
      %s266 = scalar_lea.vmem %s3, %s265
      %s267 = smul.u32 2, %s19
      %p269 = scmp.eq.s32.totalorder %s21, 0
      // Predicated region
      $region33: #{self_attention_forward.6} parent=31 // pred_check
        %p270 = pneg %p269
      $region34: #{self_attention_forward.6} parent=31 // pred_check_branch
        %272 = sbr.rel (%p270) target = $region36
      $region35: #{self_attention_forward.6} parent=31 // pred_region
        %vm273 = vcmask 7168
        %274 = vst.msk [vmem:[#allocation2] sm:$0xff] %vm273, -inf
        %275 = vst.msk [vmem:[#allocation2 + $0x8] sm:$0xff] %vm273, -inf
        %276 = vst.msk [vmem:[#allocation3] sm:$0xff] %vm273, 0.0
        %277 = vst.msk [vmem:[#allocation3 + $0x8] sm:$0xff] %vm273, 0.0
        %vm278 = vcmask 130048
        %279 = vst.msk [vmem:[#allocation4] sm:$0xff] %vm278, 0.0
        %280 = vst.msk [vmem:[#allocation4 + $0x8] sm:$0xff] %vm278, 0.0
      $region36: #{self_attention_forward.6} parent=31 // pred_fallthru
        _
      %s281 = smul.u32 %s20, 8
      %s282 = smul.u32 %s21, 8
      %s283 = sadd.s32 %s281, 8
      %p284 = scmp.lt.s32.totalorder %s282, %s283
      // Predicated region
      $region37: #{self_attention_forward.6} parent=31 // pred_check
        %p285 = pneg %p284
      $region38: #{self_attention_forward.6} parent=31 // pred_check_branch
        %287 = sbr.rel (%p285) target = $region40
      $region39: #{self_attention_forward.6} parent=31 // pred_region
        %v288 = vld [vmem:[%s251] sm:$0xf]
        %v289 = vld [vmem:[%s258] sm:$0xf]
        %v290 = vlaneseq
        %v291 = vshrl.u32 %v290, 7
        %v292 = vstv %s281
        %v293 = vadd.s32 %v292, %v291
        %v294 = vlaneseq
        %v295 = vand.u32 %v294, 127
        %v296 = vstv %s282
        %v297 = vadd.s32 %v296, %v295
        %vm298 = vcmp.le.s32.totalorder %v297, %v293
        %v299 = vld [vmem:[%s243] sm:$0xf]
        %vm300 = vcmask 130048
        %v302 = vsel %vm300, %v299, 0
        %v305 = vsel %vm300, %v288, 0
        %307 = vmatprep.subr.bf16.mxu0 0
        %308 = vmatpush1.bf16.xpose.msra.mxu0 %v305
        %309 = vmatprep.subr.bf16.mxu0 0
        %310 = vmatpush1.bf16.xpose.msra.mxu0 0
        %311 = vmatprep.subr.bf16.mxu0 0
        %312 = vmatpush1.bf16.xpose.msra.mxu0 0
        %313 = vmatprep.subr.bf16.mxu0 0
        %314 = vmatpush1.bf16.xpose.msra.mxu0 0
        %315 = vmatprep.subr.bf16.mxu0 0
        %316 = vmatpush1.bf16.xpose.msra.mxu0 0
        %317 = vmatprep.subr.bf16.mxu0 0
        %318 = vmatpush1.bf16.xpose.msra.mxu0 0
        %319 = vmatprep.subr.bf16.mxu0 0
        %320 = vmatpush1.bf16.xpose.msra.mxu0 0
        %321 = vmatprep.subr.bf16.mxu0 0
        %322 = vmatpush1.bf16.xpose.msra.mxu0 0
        %323 = vmatprep.subr.bf16.mxu0 0
        %324 = vmatpush1.bf16.xpose.msra.mxu0 0
        %325 = vmatprep.subr.bf16.mxu0 0
        %326 = vmatpush1.bf16.xpose.msra.mxu0 0
        %327 = vmatprep.subr.bf16.mxu0 0
        %328 = vmatpush1.bf16.xpose.msra.mxu0 0
        %329 = vmatprep.subr.bf16.mxu0 0
        %330 = vmatpush1.bf16.xpose.msra.mxu0 0
        %331 = vmatprep.subr.bf16.mxu0 0
        %332 = vmatpush1.bf16.xpose.msra.mxu0 0
        %333 = vmatprep.subr.bf16.mxu0 0
        %334 = vmatpush1.bf16.xpose.msra.mxu0 0
        %335 = vmatprep.subr.bf16.mxu0 0
        %336 = vmatpush1.bf16.xpose.msra.mxu0 0
        %337 = vmatprep.subr.bf16.mxu0 0
        %338 = vmatpush1.bf16.xpose.msra.mxu0 0
        %339 = vmatprep.mubr.bf16.mxu0 0
        %340 = vmatmul.mubr.bf16.gmra.mrb[0].mxu0 %v302
        %v341 = vpop.f32.mrb[0].mxu0
        %v342 = vadd.f32 0.0, %v341
        %v343 = vpop.f32.mrb[0].mxu0
        %v344 = vpop.f32.mrb[0].mxu0
        %v345 = vpop.f32.mrb[0].mxu0
        %346 = vdwg.mxu0
        %v347 = vmul.f32 %v342, 0.25
        %v348 = vsel %vm298, %v347, -inf
        %v349 = vld [vmem:[#allocation2] sm:$0xff]
        %vm350 = vcmask 64512
        %v351 = vsel %vm350, %v348, -inf
        %352 = vmax.xlane.f32.xlu0 %v351
        %v353 = vpop.xlane.xlu0 %352
        %v354 = vmax.f32 %v349, %v353
        %v355 = vsub.f32 %v349, %v354
        %v356 = vmul.f32 %v355, 1.442695
        %v357 = vpow.pop %v356
        %359 = vset.pattern.permute.xlu0 0
        %360 = vperm.xlu0 %359, %v354
        %v361 = vpop.permute.xlu0 %360
        %v363 = vsub.f32 %v348, %v361
        %v364 = vmul.f32 %v363, 1.442695
        %v365 = vpow.pop %v364
        %v366 = vld [vmem:[#allocation3] sm:$0xff]
        %v367 = vmul.f32 %v357, %v366
        %v368 = vsel %vm350, %v365, 0.0
        %369 = vadd.xlane.f32.xlu0 %v368
        %v370 = vpop.xlane.xlu0 %369
        %v371 = vadd.f32 %v367, %v370
        %vm372 = vcmask 7168
        %373 = vst.msk [vmem:[#allocation3] sm:$0xff] %vm372, %v371
        %v374 = vpack.c.bf16 %v365, %v365
        %v376 = vsel %vm350, %v374, 0
        %vm378 = vcmask 1043456
        %v380 = vsel %vm378, %v289, 0
        %382 = vmatprep.subr.bf16.mxu0 0
        %383 = vmatpush1.bf16.msra.mxu0 %v380
        %384 = vmatprep.subr.bf16.mxu0 0
        %385 = vmatpush1.bf16.msra.mxu0 0
        %386 = vmatprep.subr.bf16.mxu0 0
        %387 = vmatpush1.bf16.msra.mxu0 0
        %388 = vmatprep.subr.bf16.mxu0 0
        %389 = vmatpush1.bf16.msra.mxu0 0
        %390 = vmatprep.subr.bf16.mxu0 0
        %391 = vmatpush1.bf16.msra.mxu0 0
        %392 = vmatprep.subr.bf16.mxu0 0
        %393 = vmatpush1.bf16.msra.mxu0 0
        %394 = vmatprep.subr.bf16.mxu0 0
        %395 = vmatpush1.bf16.msra.mxu0 0
        %396 = vmatprep.subr.bf16.mxu0 0
        %397 = vmatpush1.bf16.msra.mxu0 0
        %398 = vmatprep.subr.bf16.mxu0 0
        %399 = vmatpush1.bf16.msra.mxu0 0
        %400 = vmatprep.subr.bf16.mxu0 0
        %401 = vmatpush1.bf16.msra.mxu0 0
        %402 = vmatprep.subr.bf16.mxu0 0
        %403 = vmatpush1.bf16.msra.mxu0 0
        %404 = vmatprep.subr.bf16.mxu0 0
        %405 = vmatpush1.bf16.msra.mxu0 0
        %406 = vmatprep.subr.bf16.mxu0 0
        %407 = vmatpush1.bf16.msra.mxu0 0
        %408 = vmatprep.subr.bf16.mxu0 0
        %409 = vmatpush1.bf16.msra.mxu0 0
        %410 = vmatprep.subr.bf16.mxu0 0
        %411 = vmatpush1.bf16.msra.mxu0 0
        %412 = vmatprep.subr.bf16.mxu0 0
        %413 = vmatpush1.bf16.msra.mxu0 0
        %414 = vmatprep.mubr.bf16.mxu0 0
        %415 = vmatmul.mubr.bf16.gmra.mrb[0].mxu0 %v376
        %v416 = vpop.f32.mrb[0].mxu0
        %v417 = vadd.f32 0.0, %v416
        %v418 = vpop.f32.mrb[0].mxu0
        %v419 = vpop.f32.mrb[0].mxu0
        %v420 = vpop.f32.mrb[0].mxu0
        %421 = vdwg.mxu0
        %v422 = vld [vmem:[#allocation4] sm:$0xff]
        %424 = vset.pattern.permute.xlu0 0
        %425 = vperm.xlu0 %424, %v357
        %v426 = vpop.permute.xlu0 %425
        %v428 = vmul.f32 %v426, %v422
        %v429 = vadd.f32 %v428, %v417
        %430 = vst.msk [vmem:[#allocation4] sm:$0xff] %vm300, %v429
        %431 = vst.msk [vmem:[#allocation2] sm:$0xff] %vm372, %v354
        %s432 = scalar_lea.vmem %s243, 4
        %v433 = vld [vmem:[%s432] sm:$0xf]
        %v435 = vsel %vm300, %v433, 0
        %437 = vmatprep.subr.bf16.mxu0 0
        %438 = vmatpush1.bf16.xpose.msra.mxu0 %v305
        %439 = vmatprep.subr.bf16.mxu0 0
        %440 = vmatpush1.bf16.xpose.msra.mxu0 0
        %441 = vmatprep.subr.bf16.mxu0 0
        %442 = vmatpush1.bf16.xpose.msra.mxu0 0
        %443 = vmatprep.subr.bf16.mxu0 0
        %444 = vmatpush1.bf16.xpose.msra.mxu0 0
        %445 = vmatprep.subr.bf16.mxu0 0
        %446 = vmatpush1.bf16.xpose.msra.mxu0 0
        %447 = vmatprep.subr.bf16.mxu0 0
        %448 = vmatpush1.bf16.xpose.msra.mxu0 0
        %449 = vmatprep.subr.bf16.mxu0 0
        %450 = vmatpush1.bf16.xpose.msra.mxu0 0
        %451 = vmatprep.subr.bf16.mxu0 0
        %452 = vmatpush1.bf16.xpose.msra.mxu0 0
        %453 = vmatprep.subr.bf16.mxu0 0
        %454 = vmatpush1.bf16.xpose.msra.mxu0 0
        %455 = vmatprep.subr.bf16.mxu0 0
        %456 = vmatpush1.bf16.xpose.msra.mxu0 0
        %457 = vmatprep.subr.bf16.mxu0 0
        %458 = vmatpush1.bf16.xpose.msra.mxu0 0
        %459 = vmatprep.subr.bf16.mxu0 0
        %460 = vmatpush1.bf16.xpose.msra.mxu0 0
        %461 = vmatprep.subr.bf16.mxu0 0
        %462 = vmatpush1.bf16.xpose.msra.mxu0 0
        %463 = vmatprep.subr.bf16.mxu0 0
        %464 = vmatpush1.bf16.xpose.msra.mxu0 0
        %465 = vmatprep.subr.bf16.mxu0 0
        %466 = vmatpush1.bf16.xpose.msra.mxu0 0
        %467 = vmatprep.subr.bf16.mxu0 0
        %468 = vmatpush1.bf16.xpose.msra.mxu0 0
        %469 = vmatprep.mubr.bf16.mxu0 0
        %470 = vmatmul.mubr.bf16.gmra.mrb[0].mxu0 %v435
        %v471 = vpop.f32.mrb[0].mxu0
        %v472 = vadd.f32 0.0, %v471
        %v473 = vpop.f32.mrb[0].mxu0
        %v474 = vpop.f32.mrb[0].mxu0
        %v475 = vpop.f32.mrb[0].mxu0
        %476 = vdwg.mxu0
        %v477 = vmul.f32 %v472, 0.25
        %v478 = vsel %vm298, %v477, -inf
        %s479 = scalar_lea.vmem [#allocation2], 8
        %v480 = vld [vmem:[%s479] sm:$0xff]
        %v481 = vsel %vm350, %v478, -inf
        %482 = vmax.xlane.f32.xlu0 %v481
        %v483 = vpop.xlane.xlu0 %482
        %v484 = vmax.f32 %v480, %v483
        %v485 = vsub.f32 %v480, %v484
        %v486 = vmul.f32 %v485, 1.442695
        %v487 = vpow.pop %v486
        %489 = vset.pattern.permute.xlu0 0
        %490 = vperm.xlu0 %489, %v484
        %v491 = vpop.permute.xlu0 %490
        %v493 = vsub.f32 %v478, %v491
        %v494 = vmul.f32 %v493, 1.442695
        %v495 = vpow.pop %v494
        %s496 = scalar_lea.vmem [#allocation3], 8
        %v497 = vld [vmem:[%s496] sm:$0xff]
        %v498 = vmul.f32 %v487, %v497
        %v499 = vsel %vm350, %v495, 0.0
        %500 = vadd.xlane.f32.xlu0 %v499
        %v501 = vpop.xlane.xlu0 %500
        %v502 = vadd.f32 %v498, %v501
        %503 = vst.msk [vmem:[%s496] sm:$0xff] %vm372, %v502
        %v504 = vpack.c.bf16 %v495, %v495
        %v506 = vsel %vm350, %v504, 0
        %508 = vmatprep.subr.bf16.mxu0 0
        %509 = vmatpush1.bf16.msra.mxu0 %v380
        %510 = vmatprep.subr.bf16.mxu0 0
        %511 = vmatpush1.bf16.msra.mxu0 0
        %512 = vmatprep.subr.bf16.mxu0 0
        %513 = vmatpush1.bf16.msra.mxu0 0
        %514 = vmatprep.subr.bf16.mxu0 0
        %515 = vmatpush1.bf16.msra.mxu0 0
        %516 = vmatprep.subr.bf16.mxu0 0
        %517 = vmatpush1.bf16.msra.mxu0 0
        %518 = vmatprep.subr.bf16.mxu0 0
        %519 = vmatpush1.bf16.msra.mxu0 0
        %520 = vmatprep.subr.bf16.mxu0 0
        %521 = vmatpush1.bf16.msra.mxu0 0
        %522 = vmatprep.subr.bf16.mxu0 0
        %523 = vmatpush1.bf16.msra.mxu0 0
        %524 = vmatprep.subr.bf16.mxu0 0
        %525 = vmatpush1.bf16.msra.mxu0 0
        %526 = vmatprep.subr.bf16.mxu0 0
        %527 = vmatpush1.bf16.msra.mxu0 0
        %528 = vmatprep.subr.bf16.mxu0 0
        %529 = vmatpush1.bf16.msra.mxu0 0
        %530 = vmatprep.subr.bf16.mxu0 0
        %531 = vmatpush1.bf16.msra.mxu0 0
        %532 = vmatprep.subr.bf16.mxu0 0
        %533 = vmatpush1.bf16.msra.mxu0 0
        %534 = vmatprep.subr.bf16.mxu0 0
        %535 = vmatpush1.bf16.msra.mxu0 0
        %536 = vmatprep.subr.bf16.mxu0 0
        %537 = vmatpush1.bf16.msra.mxu0 0
        %538 = vmatprep.subr.bf16.mxu0 0
        %539 = vmatpush1.bf16.msra.mxu0 0
        %540 = vmatprep.mubr.bf16.mxu0 0
        %541 = vmatmul.mubr.bf16.gmra.mrb[0].mxu0 %v506
        %v542 = vpop.f32.mrb[0].mxu0
        %v543 = vadd.f32 0.0, %v542
        %v544 = vpop.f32.mrb[0].mxu0
        %v545 = vpop.f32.mrb[0].mxu0
        %v546 = vpop.f32.mrb[0].mxu0
        %547 = vdwg.mxu0
        %s548 = scalar_lea.vmem [#allocation4], 8
        %v549 = vld [vmem:[%s548] sm:$0xff]
        %551 = vset.pattern.permute.xlu0 0
        %552 = vperm.xlu0 %551, %v487
        %v553 = vpop.permute.xlu0 %552
        %v555 = vmul.f32 %v553, %v549
        %v556 = vadd.f32 %v555, %v543
        %557 = vst.msk [vmem:[%s548] sm:$0xff] %vm300, %v556
        %558 = vst.msk [vmem:[%s479] sm:$0xff] %vm372, %v484
      $region40: #{self_attention_forward.6} parent=31 // pred_fallthru
        _
      // Predicated region
      $region41: #{self_attention_forward.6} parent=31 // pred_check
        %p559 = pneg %p269
      $region42: #{self_attention_forward.6} parent=31 // pred_check_branch
        %561 = sbr.rel (%p559) target = $region44
      $region43: #{self_attention_forward.6} parent=31 // pred_region
        %v562 = vld [vmem:[#allocation3] sm:$0xff]
        %v563 = vrcp.pop %v562
        %v564 = vld [vmem:[#allocation4] sm:$0xff]
        %566 = vset.pattern.permute.xlu0 0
        %567 = vperm.xlu0 %566, %v563
        %v568 = vpop.permute.xlu0 %567
        %v570 = vmul.f32 %v564, %v568
        %v571 = vpack.c.bf16 %v570, %v570
        %vm572 = vcmask 125952
        %573 = vst.msk [vmem:[%s266] sm:$0xf] %vm572, %v571
        %s574 = scalar_lea.vmem [#allocation3], 8
        %v575 = vld [vmem:[%s574] sm:$0xff]
        %v576 = vrcp.pop %v575
        %s577 = scalar_lea.vmem [#allocation4], 8
        %v578 = vld [vmem:[%s577] sm:$0xff]
        %580 = vset.pattern.permute.xlu0 0
        %581 = vperm.xlu0 %580, %v576
        %v582 = vpop.permute.xlu0 %581
        %v584 = vmul.f32 %v578, %v582
        %v585 = vpack.c.bf16 %v584, %v584
        %s586 = scalar_lea.vmem %s266, 4
        %587 = vst.msk [vmem:[%s586] sm:$0xf] %vm572, %v585
      $region44: #{self_attention_forward.6} parent=31 // pred_fallthru
        _
      %s588 = smul.u32 2, %s19
      %p589 = scmp.lt.s32.totalorder %s588, 3
      %s590 = scalar_select %p589, %s588, 3
      %p591 = scmp.lt.s32.totalorder %s20, 0
      %s592 = scalar_select %p591, %s20, 0
      %s593 = sadd.s32 %s592, %s590
      %s594 = smul.addr %s593, 4
      %s595 = scalar_lea.vmem %s3, %s594
      // Predicated region
      $region45: #{self_attention_forward.6} parent=31 // pred_check
        %p596 = pneg %p137
      $region46: #{self_attention_forward.6} parent=31 // pred_check_branch
        %598 = sbr.rel (%p596) target = $region48
      $region47: #{self_attention_forward.6} parent=31 // pred_region
        %s599 = smul.u32 2, %s19
      $region48: #{self_attention_forward.6} parent=31 // pred_fallthru
        _
    $region32: #{self_attention_forward.6} parent=5 // pred_fallthru
      _
    %p600 = scmp.le.s32.totalorder 2, %s9
    // Predicated region
    $region49: #{self_attention_forward.6} parent=5 // pred_check
      %p601 = pneg %p600
    $region50: #{self_attention_forward.6} parent=5 // pred_check_branch
      %603 = sbr.rel (%p601) target = $region52
    $region51: #{self_attention_forward.6} parent=5 // pred_region
      %s604 = ssub.s32 %s9, 2
      // Predicated region
      $region53: #{self_attention_forward.6} parent=51 // pred_check
        %p605 = pneg %p143
      $region54: #{self_attention_forward.6} parent=51 // pred_check_branch
        %607 = sbr.rel (%p605) target = $region56
      $region55: #{self_attention_forward.6} parent=51 // pred_region
        %s608 = smul.u32 2, %s22
        %p609 = scmp.lt.s32.totalorder %s608, 3
        %s610 = scalar_select %p609, %s608, 3
        %p611 = scmp.lt.s32.totalorder %s23, 0
        %s612 = scalar_select %p611, %s23, 0
        %s613 = sadd.s32 %s612, %s610
        %s614 = smul.addr %s613, 4
        %s615 = scalar_lea.vmem %s3, %s614
      $region56: #{self_attention_forward.6} parent=51 // pred_fallthru
        _
    $region52: #{self_attention_forward.6} parent=5 // pred_fallthru
      _
  $region6: #{self_attention_forward.6} parent=0 // loop_footer
    %s13 = sadd.s32 1, %s9
  $region7: #{self_attention_forward.6} parent=0 // loop_footer_branch
    %8 = sbr.rel target = $region3
  $region8: #{self_attention_forward.6} parent=0 // loop_exit
    _

</llo_original>
